<compile_context>
chip_gen: v6e
topology: v6e:2x2x1
jax: 0.10.0
libtpu: 0.0.40
codegen_flags: <defaults>
</compile_context>

<pallas_src>
import functools
import math
from typing import NamedTuple, Optional

import jax
import jax.numpy as jnp
from jax.experimental import pallas as pl
from jax.experimental.pallas import tpu as pltpu

LANE = 128                         # last dim padded to a multiple of the lane width
_SUBLANE_MIN = {1: 32, 2: 16, 4: 8}  # min second-to-last block dim per itemsize


def _round_up(n, m):
    return (n + m - 1) // m * m


def _vmem_capacity_bytes() -> int:
    """Physical VMEM per TensorCore (128 MiB v5e/v6e, 64 MiB v7x)."""
    try:
        return int(pltpu.get_tpu_info().vmem_capacity_bytes)
    except Exception:
        return 64 << 20            # conservative fallback (v7x-sized)


class GRUGateParams(NamedTuple):
    """Fused / transposed / padded weights. Build once (outside the hot loop)."""
    w_fused: jax.Array   # [Dp, 3*Dp] = [W_z.T | W_r.T | W_g.T]   (compute dtype)
    u_fused: jax.Array   # [Dp, 2*Dp] = [U_z.T | U_r.T]
    u_g:     jax.Array   # [Dp, Dp]
    b_z:     jax.Array   # [1, Dp] float32


def prepare_gru_gate_params(params, *, compute_dtype=jnp.bfloat16):
    """One-time prep: PyTorch [out,in] -> [in,out], zero-pad to lane width, fuse, cast.

    Pass compute_dtype=jnp.float32 for exact f32 parity with the PyTorch module
    (weight VMEM doubles, sublane minimum drops to 8).
    """
    d = params["w_z"].shape[0]
    dp = _round_up(max(d, LANE), LANE)

    def prep(w):
        w = jnp.asarray(w, jnp.float32).T                   # [out,in] -> [in,out]
        w = jnp.pad(w, ((0, dp - d), (0, dp - d)))          # zero pad: keeps GEMM exact
        return w.astype(compute_dtype)

    w_fused = jnp.concatenate(
        [prep(params["w_z"]), prep(params["w_r"]), prep(params["w_g"])], axis=1)
    u_fused = jnp.concatenate([prep(params["u_z"]), prep(params["u_r"])], axis=1)
    u_g = prep(params["u_g"])
    b_z = jnp.pad(jnp.asarray(params["b_z"], jnp.float32), (0, dp - d)).reshape(1, dp)
    return GRUGateParams(w_fused, u_fused, u_g, b_z)


def _gru_gate_kernel(x_ref, y_ref, w_ref, u_ref, ug_ref, bz_ref, o_ref, *,
                     compute_dtype):
    dp = x_ref.shape[-1]
    x_in = x_ref[...]                           # (tm, Dp), original dtype
    x_f = x_in.astype(jnp.float32)              # blend / r*x operand in f32
    x_c = x_in.astype(compute_dtype)            # MXU operand (bf16)
    y_c = y_ref[...].astype(compute_dtype)

    # Fused y-side GEMM: [tm, Dp] @ [Dp, 3Dp] -> z | r | g pre-activations.
    wy = jnp.dot(y_c, w_ref[...], preferred_element_type=jnp.float32)
    # Fused x-side GEMM: [tm, Dp] @ [Dp, 2Dp] -> z | r contributions.
    ux = jnp.dot(x_c, u_ref[...], preferred_element_type=jnp.float32)

    z = jax.nn.sigmoid((wy[:, :dp] + bz_ref[...]) + ux[:, :dp])
    r = jax.nn.sigmoid(wy[:, dp:2 * dp] + ux[:, dp:])
    rx = (r * x_f).astype(compute_dtype)
    h_hat = jnp.tanh(wy[:, 2 * dp:]
                     + jnp.dot(rx, ug_ref[...], preferred_element_type=jnp.float32))
    # (1-z)*x + z*h_hat  ==  x + z*(h_hat - x)   (one fewer VPU op per element)
    o_ref[...] = (x_f + z * (h_hat - x_f)).astype(o_ref.dtype)


def gru_gate(x, y, prepared: GRUGateParams, *, tile_m: Optional[int] = None,
             weight_buffer_count: Optional[int] = 1):
    """x, y: [..., d_model]. `prepared` from prepare_gru_gate_params()."""
    assert x.shape == y.shape, "x and y must have the same shape"
    d = x.shape[-1]
    dp = prepared.w_fused.shape[0]
    assert d <= dp and prepared.w_fused.shape[1] == 3 * dp
    compute_dtype = prepared.w_fused.dtype
    out_dtype = x.dtype

    m = math.prod(x.shape[:-1]) if x.ndim > 1 else 1
    in_it = jnp.dtype(x.dtype).itemsize
    out_it = jnp.dtype(out_dtype).itemsize
    cdt_it = jnp.dtype(compute_dtype).itemsize
    sub = max(_SUBLANE_MIN.get(in_it, 8), _SUBLANE_MIN.get(out_it, 8))

    # Generation-aware VMEM ceiling: ~109 MiB on v5e/v6e, ~54 MiB on v7x.
    cap = max(32 << 20, int(_vmem_capacity_bytes() * 0.85))

    # ---- tile selection (generation / shape aware) ------------------------
    if tile_m is None:
        tile_m = 512 if (cap >= (96 << 20) and dp <= 512) else 256
    tile_m = max(sub, _round_up(tile_m, sub))
    tm = min(tile_m, _round_up(m, sub))
    # Guarantee >= 2 grid steps when the row count allows it, so the single
    # "parallel" axis can shard across v7x's two TensorCores (harmless on
    # single-TC chips: one extra ~0.35 us grid step).
    if pl.cdiv(m, tm) < 2 and m >= 2 * sub:
        half = _round_up(-(-m // 2), 256 if m >= 512 else sub)
        tm = min(tm, max(sub, half))

    # ---- VMEM budget: resident weights + pipelined row tiles + f32 temps ---
    nbuf = weight_buffer_count if weight_buffer_count else 2
    weight_bytes = (6 * dp * dp * cdt_it + 8 * dp * 4) * nbuf

    def vmem_est(t):
        act = 2 * t * dp * (2 * in_it + out_it)   # double-buffered x / y / out tiles
        f32_tmp = 40 * t * dp                     # wy(3Dp)+ux(2Dp)+z/r/x_f/rx/h_hat
        return weight_bytes + act + f32_tmp + (2 << 20)

    while vmem_est(tm) > cap and tm > sub:
        tm = max(sub, _round_up(tm // 2, sub))
    vmem_limit = int(min(max(vmem_est(tm) * 5 // 4, 32 << 20), cap))

    grid = (pl.cdiv(m, tm),)

    # ---- activations: original dtype (cast happens in-kernel), no row pad --
    x2 = x.reshape(m, d)
    y2 = y.reshape(m, d)
    if dp != d:
        # Lane pad MUST be zeros: padded K columns hit zero-padded weight rows.
        x2 = jnp.pad(x2, ((0, 0), (0, dp - d)))
        y2 = jnp.pad(y2, ((0, 0), (0, dp - d)))

    row_spec = pl.BlockSpec((tm, dp), lambda i: (i, 0))

    # TODO(synk): for Dp >= ~2048 on v7x (64 MiB VMEM) add a column-tiled grid
    # axis that streams w_fused/u_fused blocks (or an fp8 weight variant)
    # instead of keeping all 6*Dp^2 weight bytes resident.
    def const_spec(shape):
        if weight_buffer_count is None:
            return pl.BlockSpec(shape, lambda i: (0, 0))
        # Constant index_map -> double buffering never overlaps any DMA; keep
        # a single resident copy (default Buffered(1)).
        return pl.BlockSpec(shape, lambda i: (0, 0),
                            pipeline_mode=pl.Buffered(weight_buffer_count))

    cost = pl.CostEstimate(
        flops=12 * m * dp * dp + 10 * m * dp,
        transcendentals=3 * m * dp,
        bytes_accessed=m * dp * (2 * in_it + out_it) + 6 * dp * dp * cdt_it + dp * 4,
    )

    out2 = pl.pallas_call(
        functools.partial(_gru_gate_kernel, compute_dtype=compute_dtype),
        out_shape=jax.ShapeDtypeStruct((m, dp), out_dtype),
        grid_spec=pltpu.PrefetchScalarGridSpec(
            num_scalar_prefetch=0,
            grid=grid,
            in_specs=[row_spec, row_spec,
                      const_spec((dp, 3 * dp)),
                      const_spec((dp, 2 * dp)),
                      const_spec((dp, dp)),
                      const_spec((1, dp))],
            out_specs=row_spec,
        ),
        compiler_params=pltpu.CompilerParams(
            dimension_semantics=("parallel",),
            vmem_limit_bytes=vmem_limit,
        ),
        cost_estimate=cost,
    )(x2, y2, prepared.w_fused, prepared.u_fused, prepared.u_g, prepared.b_z)

    if dp != d:
        out2 = out2[:, :d]
    return out2.reshape(x.shape)


def _reference(x, y, params):
    """Pure-JAX f32 reference matching the PyTorch forward exactly."""
    lin = lambda t, w: jnp.einsum("bsd,od->bso", t, w)
    z = jax.nn.sigmoid(lin(y, params["w_z"]) + params["b_z"] + lin(x, params["u_z"]))
    r = jax.nn.sigmoid(lin(y, params["w_r"]) + lin(x, params["u_r"]))
    h_hat = jnp.tanh(lin(y, params["w_g"]) + lin(r * x, params["u_g"]))
    return (1.0 - z) * x + z * h_hat


if __name__ == "__main__":
    batch, seq, d_model = 2, 8, 32
    key = jax.random.PRNGKey(0)
    keys = jax.random.split(key, 8)

    # Deterministic synthetic parameters (PyTorch Linear convention: [out, in]).
    scale = 1.0 / jnp.sqrt(d_model)
    params = {
        "w_r": jax.random.uniform(keys[0], (d_model, d_model), jnp.float32, -scale, scale),
        "u_r": jax.random.uniform(keys[1], (d_model, d_model), jnp.float32, -scale, scale),
        "w_z": jax.random.uniform(keys[2], (d_model, d_model), jnp.float32, -scale, scale),
        "u_z": jax.random.uniform(keys[3], (d_model, d_model), jnp.float32, -scale, scale),
        "w_g": jax.random.uniform(keys[4], (d_model, d_model), jnp.float32, -scale, scale),
        "u_g": jax.random.uniform(keys[5], (d_model, d_model), jnp.float32, -scale, scale),
        # init_bias(): linear_w_z.bias filled with -2
        "b_z": jnp.full((d_model,), -2.0, jnp.float32),
    }

    x = jax.random.normal(keys[6], (batch, seq, d_model), jnp.float32)
    y = jax.random.normal(keys[7], (batch, seq, d_model), jnp.float32)

    # One-time weight prep (hoisted out of the hot path).
    prepared = prepare_gru_gate_params(params, compute_dtype=jnp.bfloat16)

    run = jax.jit(gru_gate)
    try:
        out = jax.block_until_ready(run(x, y, prepared))
    except Exception:
        # Compatibility fallback if this jax build rejects pipeline_mode /
        # pl.Buffered(1): plain (double-buffered) constant BlockSpecs.
        run = jax.jit(functools.partial(gru_gate, weight_buffer_count=None))
        out = jax.block_until_ready(run(x, y, prepared))

    ref = _reference(x, y, params)
    assert out.shape == (batch, seq, d_model)
    assert out.dtype == x.dtype
    max_err = jnp.max(jnp.abs(out - ref))
    # bf16 matmul inputs with f32 accumulation: ~1e-2-scale error vs f32 reference.
    assert jnp.allclose(out, ref, atol=5e-2, rtol=5e-2), f"mismatch, max|err|={max_err}"

    print("KERNEL_OK")
</pallas_src>

<mosaic_0001>
module attributes {stable_mosaic.version = 11 : i64} {
  func.func @_gru_gate_kernel(%arg0: i32, %arg1: memref<8x128xf32, #tpu.memory_space<vmem>>, %arg2: memref<8x128xf32, #tpu.memory_space<vmem>>, %arg3: memref<128x384xbf16, #tpu.memory_space<vmem>>, %arg4: memref<128x256xbf16, #tpu.memory_space<vmem>>, %arg5: memref<128x128xbf16, #tpu.memory_space<vmem>>, %arg6: memref<1x128xf32, #tpu.memory_space<vmem>>, %arg7: memref<8x128xf32, #tpu.memory_space<vmem>>) attributes {dimension_semantics = [#tpu.dimension_semantics<parallel>], iteration_bounds = array<i64: 2>, scalar_prefetch = 0 : i64, scratch_operands = 0 : i64, tpu.core_type = #tpu.core_type<tc>, window_params = [{transform_indices = @transform_0, window_bounds = array<i64: 8, 128>}, {transform_indices = @transform_1, window_bounds = array<i64: 8, 128>}, {pipeline_mode = #tpu.pipeline_mode<synchronous>, transform_indices = @transform_2, window_bounds = array<i64: 128, 384>}, {pipeline_mode = #tpu.pipeline_mode<synchronous>, transform_indices = @transform_3, window_bounds = array<i64: 128, 256>}, {pipeline_mode = #tpu.pipeline_mode<synchronous>, transform_indices = @transform_4, window_bounds = array<i64: 128, 128>}, {pipeline_mode = #tpu.pipeline_mode<synchronous>, transform_indices = @transform_5, window_bounds = array<i64: 1, 128>}, {transform_indices = @transform_6, window_bounds = array<i64: 8, 128>}]} {
    %c0 = arith.constant 0 : index
    %c0_0 = arith.constant 0 : index
    %0 = vector.load %arg1[%c0, %c0_0] : memref<8x128xf32, #tpu.memory_space<vmem>>, vector<8x128xf32>
    %1 = arith.truncf %0 : vector<8x128xf32> to vector<8x128xbf16>
    %c0_1 = arith.constant 0 : index
    %c0_2 = arith.constant 0 : index
    %2 = vector.load %arg2[%c0_1, %c0_2] : memref<8x128xf32, #tpu.memory_space<vmem>>, vector<8x128xf32>
    %3 = arith.truncf %2 : vector<8x128xf32> to vector<8x128xbf16>
    %c0_3 = arith.constant 0 : index
    %c0_4 = arith.constant 0 : index
    %4 = vector.load %arg3[%c0_3, %c0_4] : memref<128x384xbf16, #tpu.memory_space<vmem>>, vector<128x384xbf16>
    %cst = arith.constant dense<0.000000e+00> : vector<8x384xf32>
    %5 = tpu.matmul %3, %4, %cst {dimension_numbers = #tpu.dot_dimension_numbers<[1], [0], [0], [1], [0, 0, 1, 1], [], []>} : vector<8x128xbf16>, vector<128x384xbf16>, vector<8x384xf32> -> vector<8x384xf32>
    %c0_5 = arith.constant 0 : index
    %c0_6 = arith.constant 0 : index
    %6 = vector.load %arg4[%c0_5, %c0_6] : memref<128x256xbf16, #tpu.memory_space<vmem>>, vector<128x256xbf16>
    %cst_7 = arith.constant dense<0.000000e+00> : vector<8x256xf32>
    %7 = tpu.matmul %1, %6, %cst_7 {dimension_numbers = #tpu.dot_dimension_numbers<[1], [0], [0], [1], [0, 0, 1, 1], [], []>} : vector<8x128xbf16>, vector<128x256xbf16>, vector<8x256xf32> -> vector<8x256xf32>
    %8 = vector.extract_strided_slice %5 {offsets = [0, 0], sizes = [8, 128], strides = [1, 1]} : vector<8x384xf32> to vector<8x128xf32>
    %c0_8 = arith.constant 0 : index
    %c0_9 = arith.constant 0 : index
    %9 = vector.load %arg6[%c0_8, %c0_9] : memref<1x128xf32, #tpu.memory_space<vmem>>, vector<1x128xf32>
    %10 = vector.broadcast %9 : vector<1x128xf32> to vector<8x128xf32>
    %11 = arith.addf %8, %10 : vector<8x128xf32>
    %12 = vector.extract_strided_slice %7 {offsets = [0, 0], sizes = [8, 128], strides = [1, 1]} : vector<8x256xf32> to vector<8x128xf32>
    %13 = arith.addf %11, %12 : vector<8x128xf32>
    %14 = arith.negf %13 : vector<8x128xf32>
    %15 = math.exp %14 : vector<8x128xf32>
    %cst_10 = arith.constant 1.000000e+00 : f32
    %16 = vector.broadcast %cst_10 : f32 to vector<8x128xf32>
    %17 = arith.addf %16, %15 : vector<8x128xf32>
    %18 = arith.divf %16, %17 : vector<8x128xf32>
    %19 = vector.extract_strided_slice %5 {offsets = [0, 128], sizes = [8, 128], strides = [1, 1]} : vector<8x384xf32> to vector<8x128xf32>
    %20 = vector.extract_strided_slice %7 {offsets = [0, 128], sizes = [8, 128], strides = [1, 1]} : vector<8x256xf32> to vector<8x128xf32>
    %21 = arith.addf %19, %20 : vector<8x128xf32>
    %22 = arith.negf %21 : vector<8x128xf32>
    %23 = math.exp %22 : vector<8x128xf32>
    %cst_11 = arith.constant 1.000000e+00 : f32
    %24 = vector.broadcast %cst_11 : f32 to vector<8x128xf32>
    %25 = arith.addf %24, %23 : vector<8x128xf32>
    %26 = arith.divf %24, %25 : vector<8x128xf32>
    %27 = arith.mulf %26, %0 : vector<8x128xf32>
    %28 = arith.truncf %27 : vector<8x128xf32> to vector<8x128xbf16>
    %29 = vector.extract_strided_slice %5 {offsets = [0, 256], sizes = [8, 128], strides = [1, 1]} : vector<8x384xf32> to vector<8x128xf32>
    %c0_12 = arith.constant 0 : index
    %c0_13 = arith.constant 0 : index
    %30 = vector.load %arg5[%c0_12, %c0_13] : memref<128x128xbf16, #tpu.memory_space<vmem>>, vector<128x128xbf16>
    %cst_14 = arith.constant dense<0.000000e+00> : vector<8x128xf32>
    %31 = tpu.matmul %28, %30, %cst_14 {dimension_numbers = #tpu.dot_dimension_numbers<[1], [0], [0], [1], [0, 0, 1, 1], [], []>} : vector<8x128xbf16>, vector<128x128xbf16>, vector<8x128xf32> -> vector<8x128xf32>
    %32 = arith.addf %29, %31 : vector<8x128xf32>
    %33 = math.tanh %32 : vector<8x128xf32>
    %34 = arith.subf %33, %0 : vector<8x128xf32>
    %35 = arith.mulf %18, %34 : vector<8x128xf32>
    %36 = arith.addf %0, %35 : vector<8x128xf32>
    %c0_15 = arith.constant 0 : index
    %c0_16 = arith.constant 0 : index
    %37 = vector.load %arg7[%c0_15, %c0_16] : memref<8x128xf32, #tpu.memory_space<vmem>>, vector<8x128xf32>
    tpu.vector_store %arg7[%c0_15, %c0_16], %36 {strides = array<i32>} : memref<8x128xf32, #tpu.memory_space<vmem>>, vector<8x128xf32>,
    return
  }
  func.func @transform_0(%arg0: i32) -> (i32, i32) {
    %c0_i32 = arith.constant 0 : i32
    %c0_i32_0 = arith.constant 0 : i32
    return %arg0, %c0_i32 : i32, i32
  }
  func.func @transform_1(%arg0: i32) -> (i32, i32) {
    %c0_i32 = arith.constant 0 : i32
    %c0_i32_0 = arith.constant 0 : i32
    return %arg0, %c0_i32 : i32, i32
  }
  func.func @transform_2(%arg0: i32) -> (i32, i32) {
    %c0_i32 = arith.constant 0 : i32
    %c0_i32_0 = arith.constant 0 : i32
    %c0_i32_1 = arith.constant 0 : i32
    return %c0_i32, %c0_i32_0 : i32, i32
  }
  func.func @transform_3(%arg0: i32) -> (i32, i32) {
    %c0_i32 = arith.constant 0 : i32
    %c0_i32_0 = arith.constant 0 : i32
    %c0_i32_1 = arith.constant 0 : i32
    return %c0_i32, %c0_i32_0 : i32, i32
  }
  func.func @transform_4(%arg0: i32) -> (i32, i32) {
    %c0_i32 = arith.constant 0 : i32
    %c0_i32_0 = arith.constant 0 : i32
    %c0_i32_1 = arith.constant 0 : i32
    return %c0_i32, %c0_i32_0 : i32, i32
  }
  func.func @transform_5(%arg0: i32) -> (i32, i32) {
    %c0_i32 = arith.constant 0 : i32
    %c0_i32_0 = arith.constant 0 : i32
    %c0_i32_1 = arith.constant 0 : i32
    return %c0_i32, %c0_i32_0 : i32, i32
  }
  func.func @transform_6(%arg0: i32) -> (i32, i32) {
    %c0_i32 = arith.constant 0 : i32
    %c0_i32_0 = arith.constant 0 : i32
    return %arg0, %c0_i32 : i32, i32
  }
}

module attributes {stable_mosaic.version = 11 : i64} {
  func.func @_gru_gate_kernel(%arg0: i32, %arg1: memref<8x128xf32, #tpu.memory_space<vmem>>, %arg2: memref<8x128xf32, #tpu.memory_space<vmem>>, %arg3: memref<128x384xbf16, #tpu.memory_space<vmem>>, %arg4: memref<128x256xbf16, #tpu.memory_space<vmem>>, %arg5: memref<128x128xbf16, #tpu.memory_space<vmem>>, %arg6: memref<1x128xf32, #tpu.memory_space<vmem>>, %arg7: memref<8x128xf32, #tpu.memory_space<vmem>>) attributes {dimension_semantics = [#tpu.dimension_semantics<parallel>], iteration_bounds = array<i64: 2>, scalar_prefetch = 0 : i64, scratch_operands = 0 : i64, tpu.core_type = #tpu.core_type<tc>, window_params = [{transform_indices = @transform_0, window_bounds = array<i64: 8, 128>}, {transform_indices = @transform_1, window_bounds = array<i64: 8, 128>}, {pipeline_mode = #tpu.pipeline_mode<synchronous>, transform_indices = @transform_2, window_bounds = array<i64: 128, 384>}, {pipeline_mode = #tpu.pipeline_mode<synchronous>, transform_indices = @transform_3, window_bounds = array<i64: 128, 256>}, {pipeline_mode = #tpu.pipeline_mode<synchronous>, transform_indices = @transform_4, window_bounds = array<i64: 128, 128>}, {pipeline_mode = #tpu.pipeline_mode<synchronous>, transform_indices = @transform_5, window_bounds = array<i64: 1, 128>}, {transform_indices = @transform_6, window_bounds = array<i64: 8, 128>}]} {
    %c0 = arith.constant 0 : index
    %c0_0 = arith.constant 0 : index
    %0 = vector.load %arg1[%c0, %c0_0] : memref<8x128xf32, #tpu.memory_space<vmem>>, vector<8x128xf32>
    %1 = arith.truncf %0 : vector<8x128xf32> to vector<8x128xbf16>
    %c0_1 = arith.constant 0 : index
    %c0_2 = arith.constant 0 : index
    %2 = vector.load %arg2[%c0_1, %c0_2] : memref<8x128xf32, #tpu.memory_space<vmem>>, vector<8x128xf32>
    %3 = arith.truncf %2 : vector<8x128xf32> to vector<8x128xbf16>
    %c0_3 = arith.constant 0 : index
    %c0_4 = arith.constant 0 : index
    %4 = vector.load %arg3[%c0_3, %c0_4] : memref<128x384xbf16, #tpu.memory_space<vmem>>, vector<128x384xbf16>
    %cst = arith.constant dense<0.000000e+00> : vector<8x384xf32>
    %5 = tpu.matmul %3, %4, %cst {dimension_numbers = #tpu.dot_dimension_numbers<[1], [0], [0], [1], [0, 0, 1, 1], [], []>} : vector<8x128xbf16>, vector<128x384xbf16>, vector<8x384xf32> -> vector<8x384xf32>
    %c0_5 = arith.constant 0 : index
    %c0_6 = arith.constant 0 : index
    %6 = vector.load %arg4[%c0_5, %c0_6] : memref<128x256xbf16, #tpu.memory_space<vmem>>, vector<128x256xbf16>
    %cst_7 = arith.constant dense<0.000000e+00> : vector<8x256xf32>
    %7 = tpu.matmul %1, %6, %cst_7 {dimension_numbers = #tpu.dot_dimension_numbers<[1], [0], [0], [1], [0, 0, 1, 1], [], []>} : vector<8x128xbf16>, vector<128x256xbf16>, vector<8x256xf32> -> vector<8x256xf32>
    %8 = vector.extract_strided_slice %5 {offsets = [0, 0], sizes = [8, 128], strides = [1, 1]} : vector<8x384xf32> to vector<8x128xf32>
    %c0_8 = arith.constant 0 : index
    %c0_9 = arith.constant 0 : index
    %9 = vector.load %arg6[%c0_8, %c0_9] : memref<1x128xf32, #tpu.memory_space<vmem>>, vector<1x128xf32>
    %10 = vector.broadcast %9 : vector<1x128xf32> to vector<8x128xf32>
    %11 = arith.addf %8, %10 : vector<8x128xf32>
    %12 = vector.extract_strided_slice %7 {offsets = [0, 0], sizes = [8, 128], strides = [1, 1]} : vector<8x256xf32> to vector<8x128xf32>
    %13 = arith.addf %11, %12 : vector<8x128xf32>
    %14 = arith.negf %13 : vector<8x128xf32>
    %15 = math.exp %14 : vector<8x128xf32>
    %cst_10 = arith.constant 1.000000e+00 : f32
    %16 = vector.broadcast %cst_10 : f32 to vector<8x128xf32>
    %17 = arith.addf %16, %15 : vector<8x128xf32>
    %18 = arith.divf %16, %17 : vector<8x128xf32>
    %19 = vector.extract_strided_slice %5 {offsets = [0, 128], sizes = [8, 128], strides = [1, 1]} : vector<8x384xf32> to vector<8x128xf32>
    %20 = vector.extract_strided_slice %7 {offsets = [0, 128], sizes = [8, 128], strides = [1, 1]} : vector<8x256xf32> to vector<8x128xf32>
    %21 = arith.addf %19, %20 : vector<8x128xf32>
    %22 = arith.negf %21 : vector<8x128xf32>
    %23 = math.exp %22 : vector<8x128xf32>
    %cst_11 = arith.constant 1.000000e+00 : f32
    %24 = vector.broadcast %cst_11 : f32 to vector<8x128xf32>
    %25 = arith.addf %24, %23 : vector<8x128xf32>
    %26 = arith.divf %24, %25 : vector<8x128xf32>
    %27 = arith.mulf %26, %0 : vector<8x128xf32>
    %28 = arith.truncf %27 : vector<8x128xf32> to vector<8x128xbf16>
    %29 = vector.extract_strided_slice %5 {offsets = [0, 256], sizes = [8, 128], strides = [1, 1]} : vector<8x384xf32> to vector<8x128xf32>
    %c0_12 = arith.constant 0 : index
    %c0_13 = arith.constant 0 : index
    %30 = vector.load %arg5[%c0_12, %c0_13] : memref<128x128xbf16, #tpu.memory_space<vmem>>, vector<128x128xbf16>
    %cst_14 = arith.constant dense<0.000000e+00> : vector<8x128xf32>
    %31 = tpu.matmul %28, %30, %cst_14 {dimension_numbers = #tpu.dot_dimension_numbers<[1], [0], [0], [1], [0, 0, 1, 1], [], []>} : vector<8x128xbf16>, vector<128x128xbf16>, vector<8x128xf32> -> vector<8x128xf32>
    %32 = arith.addf %29, %31 : vector<8x128xf32>
    %33 = math.tanh %32 : vector<8x128xf32>
    %34 = arith.subf %33, %0 : vector<8x128xf32>
    %35 = arith.mulf %18, %34 : vector<8x128xf32>
    %36 = arith.addf %0, %35 : vector<8x128xf32>
    %c0_15 = arith.constant 0 : index
    %c0_16 = arith.constant 0 : index
    %37 = vector.load %arg7[%c0_15, %c0_16] : memref<8x128xf32, #tpu.memory_space<vmem>>, vector<8x128xf32>
    tpu.vector_store %arg7[%c0_15, %c0_16], %36 {strides = array<i32>} : memref<8x128xf32, #tpu.memory_space<vmem>>, vector<8x128xf32>,
    return
  }
  func.func @transform_0(%arg0: i32) -> (i32, i32) {
    %c0_i32 = arith.constant 0 : i32
    %c0_i32_0 = arith.constant 0 : i32
    return %arg0, %c0_i32 : i32, i32
  }
  func.func @transform_1(%arg0: i32) -> (i32, i32) {
    %c0_i32 = arith.constant 0 : i32
    %c0_i32_0 = arith.constant 0 : i32
    return %arg0, %c0_i32 : i32, i32
  }
  func.func @transform_2(%arg0: i32) -> (i32, i32) {
    %c0_i32 = arith.constant 0 : i32
    %c0_i32_0 = arith.constant 0 : i32
    %c0_i32_1 = arith.constant 0 : i32
    return %c0_i32, %c0_i32_0 : i32, i32
  }
  func.func @transform_3(%arg0: i32) -> (i32, i32) {
    %c0_i32 = arith.constant 0 : i32
    %c0_i32_0 = arith.constant 0 : i32
    %c0_i32_1 = arith.constant 0 : i32
    return %c0_i32, %c0_i32_0 : i32, i32
  }
  func.func @transform_4(%arg0: i32) -> (i32, i32) {
    %c0_i32 = arith.constant 0 : i32
    %c0_i32_0 = arith.constant 0 : i32
    %c0_i32_1 = arith.constant 0 : i32
    return %c0_i32, %c0_i32_0 : i32, i32
  }
  func.func @transform_5(%arg0: i32) -> (i32, i32) {
    %c0_i32 = arith.constant 0 : i32
    %c0_i32_0 = arith.constant 0 : i32
    %c0_i32_1 = arith.constant 0 : i32
    return %c0_i32, %c0_i32_0 : i32, i32
  }
  func.func @transform_6(%arg0: i32) -> (i32, i32) {
    %c0_i32 = arith.constant 0 : i32
    %c0_i32_0 = arith.constant 0 : i32
    return %arg0, %c0_i32 : i32, i32
  }
}

</mosaic_0001>

<llo_original>
// kernel: gru_gate.1
$region0: #{gru_gate.1}
  #allocation0 [shape = 'u32[]', space=smem, size = 0x4, offset = 0x4, fixed_abs, tag = 'smem constant byte address 0x4 - core index']
  #allocation1 [shape = 'u32[144,128]{1,0:T(1,128)}', space=vmem, size = 0x12000, scoped, tag = 'internal scratch']
  %s0 = inlined_call_operand.vmem [shape: f32[16,128], index: 0, kind: input, shape index: {}]
  %s1 = inlined_call_operand.vmem [shape: f32[16,128], index: 1, kind: input, shape index: {}]
  %s2 = inlined_call_operand.hbm [shape: bf16[128,384], index: 2, kind: input, shape index: {}]
  %s3 = inlined_call_operand.hbm [shape: bf16[128,256], index: 3, kind: input, shape index: {}]
  %s4 = inlined_call_operand.vmem [shape: bf16[128,128], index: 4, kind: input, shape index: {}]
  %s5 = inlined_call_operand.vmem [shape: f32[1,128], index: 5, kind: input, shape index: {}]
  %s6 = inlined_call_operand.vmem [shape: f32[16,128], index: 6, kind: output, shape index: {}]
  %s7 = sld [smem:[#allocation0]]
  $region65: #{gru_gate.1} parent=0
    _
  %s9 = ssub.s32 1, %s7
  %s10 = scalar_select 0, %s9, %s7
  $region1: #{gru_gate.1} parent=0
    #allocation2 [shape = 'u8[98304]{0}', space=vmem, size = 0x18000, scoped, tag = 'input window, operand 2, single buffered']
    #allocation3 [shape = 's32[2]{0}', space=sflag, size = 0x8, scoped, tag = 'scoped memory for gru_gate.1']
    #allocation4 [shape = 'u8[65536]{0}', space=vmem, size = 0x10000, scoped, tag = 'input window, operand 3, single buffered']
    #allocation5 [shape = 's32[1]{0}', space=sflag, size = 0x4, scoped, tag = 'scoped memory for gru_gate.1']
    %11 = vsyncpa [#allocation3], 0
    %12 = vsyncpa [#allocation5], 0
    loop: start=0, step=1, limit=4
    $region2: #{gru_gate.1} parent=1 // loop_pre_header
      _
    $region3: #{gru_gate.1} parent=1 // loop_header
      %s14 = sphi 0, %s18
      %p15 = scmp.ge.s32.totalorder %s14, 4
      %s24 = sphi 0, %s26
      %s27 = sphi 0, %s24
      %s28 = sphi 0, %s27
      %s44 = sphi 0, %s28
      %s50 = sphi 0, %s52
      %s53 = sphi 0, %s50
      %s54 = sphi 0, %s53
      %s70 = sphi 0, %s54
      %s74 = sphi 0, %s74
      %s76 = sphi 0, %s74
      %s77 = sphi 0, %s76
      %s91 = sphi 0, %s77
      %s95 = sphi 0, %s95
      %s97 = sphi 0, %s95
      %s98 = sphi 0, %s97
      %s112 = sphi 0, %s98
      %s116 = sphi 0, %s116
      %s118 = sphi 0, %s116
      %s119 = sphi 0, %s118
      %s133 = sphi 0, %s119
      %s137 = sphi 0, %s137
      %s139 = sphi 0, %s137
      %s140 = sphi 0, %s139
      %s154 = sphi 0, %s140
      %s160 = sphi 0, %s162
      %s163 = sphi 0, %s160
      %s164 = sphi 0, %s163
      %s180 = sphi 0, %s164
    $region4: #{gru_gate.1} parent=1 // loop_header_branch
      %17 = sbr.rel (%p15) target = $region8
    $region5: #{gru_gate.1} parent=1 // loop_body
      %s19 = ssub.s32 %s14, 1
      %s20 = ssub.s32 %s14, 2
      %s21 = sadd.s32 %s14, 1
      %s22 = ssub.s32 %s14, %s21
      %p23 = scmp.eq.s32.totalorder %s22, 0
      %s25 = sadd.s32 %s24, 1
      %s26 = scalar_select %p23, %s24, %s25
      %p29 = pneg %p23
      %p30 = scmp.eq.s32.totalorder %s14, 1
      %p31 = por %p29, %p30
      %p32 = scmp.ne.s32.totalorder %s24, %s27
      %p33 = scmp.eq.s32.totalorder %s14, 0
      %p34 = por %p32, %p33
      %p35 = scmp.ne.s32.totalorder %s24, %s27
      %p36 = scmp.eq.s32.totalorder %s19, 1
      %p37 = por %p35, %p36
      %p38 = scmp.ne.s32.totalorder %s27, %s28
      %p39 = scmp.eq.s32.totalorder %s19, 0
      %p40 = por %p38, %p39
      %p41 = scmp.ne.s32.totalorder %s27, %s28
      %p42 = scmp.eq.s32.totalorder %s20, 1
      %p43 = por %p41, %p42
      %p45 = scmp.ne.s32.totalorder %s28, %s44
      %p46 = scmp.eq.s32.totalorder %s20, 0
      %p47 = por %p45, %p46
      %s48 = ssub.s32 %s14, %s21
      %p49 = scmp.eq.s32.totalorder %s48, 0
      %s51 = sadd.s32 %s50, 1
      %s52 = scalar_select %p49, %s50, %s51
      %p55 = pneg %p49
      %p56 = scmp.eq.s32.totalorder %s14, 1
      %p57 = por %p55, %p56
      %p58 = scmp.ne.s32.totalorder %s50, %s53
      %p59 = scmp.eq.s32.totalorder %s14, 0
      %p60 = por %p58, %p59
      %p61 = scmp.ne.s32.totalorder %s50, %s53
      %p62 = scmp.eq.s32.totalorder %s19, 1
      %p63 = por %p61, %p62
      %p64 = scmp.ne.s32.totalorder %s53, %s54
      %p65 = scmp.eq.s32.totalorder %s19, 0
      %p66 = por %p64, %p65
      %p67 = scmp.ne.s32.totalorder %s53, %s54
      %p68 = scmp.eq.s32.totalorder %s20, 1
      %p69 = por %p67, %p68
      %p71 = scmp.ne.s32.totalorder %s54, %s70
      %p72 = scmp.eq.s32.totalorder %s20, 0
      %p73 = por %p71, %p72
      %s75 = sadd.s32 %s74, 1
      %p78 = scmp.eq.s32.totalorder %s14, 1
      %p79 = scmp.ne.s32.totalorder %s74, %s76
      %p80 = scmp.eq.s32.totalorder %s14, 0
      %p81 = por %p79, %p80
      %p82 = scmp.ne.s32.totalorder %s74, %s76
      %p83 = scmp.eq.s32.totalorder %s19, 1
      %p84 = por %p82, %p83
      %p85 = scmp.ne.s32.totalorder %s76, %s77
      %p86 = scmp.eq.s32.totalorder %s19, 0
      %p87 = por %p85, %p86
      %p88 = scmp.ne.s32.totalorder %s76, %s77
      %p89 = scmp.eq.s32.totalorder %s20, 1
      %p90 = por %p88, %p89
      %p92 = scmp.ne.s32.totalorder %s77, %s91
      %p93 = scmp.eq.s32.totalorder %s20, 0
      %p94 = por %p92, %p93
      %s96 = sadd.s32 %s95, 1
      %p99 = scmp.eq.s32.totalorder %s14, 1
      %p100 = scmp.ne.s32.totalorder %s95, %s97
      %p101 = scmp.eq.s32.totalorder %s14, 0
      %p102 = por %p100, %p101
      %p103 = scmp.ne.s32.totalorder %s95, %s97
      %p104 = scmp.eq.s32.totalorder %s19, 1
      %p105 = por %p103, %p104
      %p106 = scmp.ne.s32.totalorder %s97, %s98
      %p107 = scmp.eq.s32.totalorder %s19, 0
      %p108 = por %p106, %p107
      %p109 = scmp.ne.s32.totalorder %s97, %s98
      %p110 = scmp.eq.s32.totalorder %s20, 1
      %p111 = por %p109, %p110
      %p113 = scmp.ne.s32.totalorder %s98, %s112
      %p114 = scmp.eq.s32.totalorder %s20, 0
      %p115 = por %p113, %p114
      %s117 = sadd.s32 %s116, 1
      %p120 = scmp.eq.s32.totalorder %s14, 1
      %p121 = scmp.ne.s32.totalorder %s116, %s118
      %p122 = scmp.eq.s32.totalorder %s14, 0
      %p123 = por %p121, %p122
      %p124 = scmp.ne.s32.totalorder %s116, %s118
      %p125 = scmp.eq.s32.totalorder %s19, 1
      %p126 = por %p124, %p125
      %p127 = scmp.ne.s32.totalorder %s118, %s119
      %p128 = scmp.eq.s32.totalorder %s19, 0
      %p129 = por %p127, %p128
      %p130 = scmp.ne.s32.totalorder %s118, %s119
      %p131 = scmp.eq.s32.totalorder %s20, 1
      %p132 = por %p130, %p131
      %p134 = scmp.ne.s32.totalorder %s119, %s133
      %p135 = scmp.eq.s32.totalorder %s20, 0
      %p136 = por %p134, %p135
      %s138 = sadd.s32 %s137, 1
      %p141 = scmp.eq.s32.totalorder %s14, 1
      %p142 = scmp.ne.s32.totalorder %s137, %s139
      %p143 = scmp.eq.s32.totalorder %s14, 0
      %p144 = por %p142, %p143
      %p145 = scmp.ne.s32.totalorder %s137, %s139
      %p146 = scmp.eq.s32.totalorder %s19, 1
      %p147 = por %p145, %p146
      %p148 = scmp.ne.s32.totalorder %s139, %s140
      %p149 = scmp.eq.s32.totalorder %s19, 0
      %p150 = por %p148, %p149
      %p151 = scmp.ne.s32.totalorder %s139, %s140
      %p152 = scmp.eq.s32.totalorder %s20, 1
      %p153 = por %p151, %p152
      %p155 = scmp.ne.s32.totalorder %s140, %s154
      %p156 = scmp.eq.s32.totalorder %s20, 0
      %p157 = por %p155, %p156
      %s158 = ssub.s32 %s14, %s21
      %p159 = scmp.eq.s32.totalorder %s158, 0
      %s161 = sadd.s32 %s160, 1
      %s162 = scalar_select %p159, %s160, %s161
      %p165 = pneg %p159
      %p166 = scmp.eq.s32.totalorder %s14, 1
      %p167 = por %p165, %p166
      %p168 = scmp.ne.s32.totalorder %s160, %s163
      %p169 = scmp.eq.s32.totalorder %s14, 0
      %p170 = por %p168, %p169
      %p171 = scmp.ne.s32.totalorder %s160, %s163
      %p172 = scmp.eq.s32.totalorder %s19, 1
      %p173 = por %p171, %p172
      %p174 = scmp.ne.s32.totalorder %s163, %s164
      %p175 = scmp.eq.s32.totalorder %s19, 0
      %p176 = por %p174, %p175
      %p177 = scmp.ne.s32.totalorder %s163, %s164
      %p178 = scmp.eq.s32.totalorder %s20, 1
      %p179 = por %p177, %p178
      %p181 = scmp.ne.s32.totalorder %s164, %s180
      %p182 = scmp.eq.s32.totalorder %s20, 0
      %p183 = por %p181, %p182
      %p184 = scmp.le.s32.totalorder 1, %s14
      %p185 = scmp.lt.s32.totalorder %s14, 3
      %p186 = pnand %p184, %p185
      %p187 = pneg %p186
      // Predicated region
      $region9: #{gru_gate.1} parent=5 // pred_check
        _
      $region10: #{gru_gate.1} parent=5 // pred_check_branch
        %189 = sbr.rel (%p186) target = $region12
      $region11: #{gru_gate.1} parent=5 // pred_region
        %s190 = ssub.s32 %s14, 1
        // Predicated region
        $region13: #{gru_gate.1} parent=11 // pred_check
          %p191 = pneg %p87
        $region14: #{gru_gate.1} parent=11 // pred_check_branch
          %193 = sbr.rel (%p191) target = $region16
        $region15: #{gru_gate.1} parent=11 // pred_region
          %s195 = ssub.s32 3072, 3072
          %196 = vsyncadd [#allocation3], %s195
          %s197 = sshll.u32 [#allocation2], 4
          %s198 = int_to_ptr.vmem [resolvable:$true] %s197
          %203 = dma.hbm_to_vmem [thread:$0]  %s2, 3072, %s198, [#allocation3], 192, 192, 12
        $region16: #{gru_gate.1} parent=11 // pred_fallthru
          _
        // Predicated region
        $region17: #{gru_gate.1} parent=11 // pred_check
          %p204 = pneg %p108
        $region18: #{gru_gate.1} parent=11 // pred_check_branch
          %206 = sbr.rel (%p204) target = $region20
        $region19: #{gru_gate.1} parent=11 // pred_region
          %s208 = ssub.s32 2048, 2048
          %209 = vsyncadd [#allocation5], %s208
          %s210 = sshll.u32 [#allocation4], 4
          %s211 = int_to_ptr.vmem [resolvable:$true] %s210
          %216 = dma.hbm_to_vmem [thread:$0]  %s3, 2048, %s211, [#allocation5], 128, 128, 8
        $region20: #{gru_gate.1} parent=11 // pred_fallthru
          _
        // Predicated region
        $region21: #{gru_gate.1} parent=11 // pred_check
          %p217 = pneg %p129
        $region22: #{gru_gate.1} parent=11 // pred_check_branch
          %219 = sbr.rel (%p217) target = $region24
        $region23: #{gru_gate.1} parent=11 // pred_region
          _
        $region24: #{gru_gate.1} parent=11 // pred_fallthru
          _
        // Predicated region
        $region25: #{gru_gate.1} parent=11 // pred_check
          %p220 = pneg %p150
        $region26: #{gru_gate.1} parent=11 // pred_check_branch
          %222 = sbr.rel (%p220) target = $region28
        $region27: #{gru_gate.1} parent=11 // pred_region
          _
        $region28: #{gru_gate.1} parent=11 // pred_fallthru
          _
      $region12: #{gru_gate.1} parent=5 // pred_fallthru
        _
      %p223 = scmp.lt.s32.totalorder %s14, 2
      // Predicated region
      $region29: #{gru_gate.1} parent=5 // pred_check
        %p224 = pneg %p223
      $region30: #{gru_gate.1} parent=5 // pred_check_branch
        %226 = sbr.rel (%p224) target = $region32
      $region31: #{gru_gate.1} parent=5 // pred_region
        // Predicated region
        $region33: #{gru_gate.1} parent=31 // pred_check
          %p227 = pneg %p34
        $region34: #{gru_gate.1} parent=31 // pred_check_branch
          %229 = sbr.rel (%p227) target = $region36
        $region35: #{gru_gate.1} parent=31 // pred_region
          %p230 = scmp.lt.s32.totalorder %s14, 1
          %s231 = scalar_select %p230, %s14, 1
          %s232 = smul.addr %s231, 8
          %s233 = scalar_lea.vmem %s0, %s232
        $region36: #{gru_gate.1} parent=31 // pred_fallthru
          _
        // Predicated region
        $region37: #{gru_gate.1} parent=31 // pred_check
          %p234 = pneg %p60
        $region38: #{gru_gate.1} parent=31 // pred_check_branch
          %236 = sbr.rel (%p234) target = $region40
        $region39: #{gru_gate.1} parent=31 // pred_region
          %p237 = scmp.lt.s32.totalorder %s14, 1
          %s238 = scalar_select %p237, %s14, 1
          %s239 = smul.addr %s238, 8
          %s240 = scalar_lea.vmem %s1, %s239
        $region40: #{gru_gate.1} parent=31 // pred_fallthru
          _
      $region32: #{gru_gate.1} parent=5 // pred_fallthru
        _
      %p241 = scmp.le.s32.totalorder 1, %s14
      %p242 = scmp.lt.s32.totalorder %s14, 3
      %p243 = pnand %p241, %p242
      %p244 = pneg %p243
      // Predicated region
      $region41: #{gru_gate.1} parent=5 // pred_check
        _
      $region42: #{gru_gate.1} parent=5 // pred_check_branch
        %246 = sbr.rel (%p243) target = $region44
      $region43: #{gru_gate.1} parent=5 // pred_region
        %s247 = ssub.s32 %s14, 1
        // Predicated region
        $region45: #{gru_gate.1} parent=43 // pred_check
          %p248 = pneg %p87
        $region46: #{gru_gate.1} parent=43 // pred_check_branch
          %250 = sbr.rel (%p248) target = $region48
        $region47: #{gru_gate.1} parent=43 // pred_region
          %251 = dma.done [#allocation3], 3072
        $region48: #{gru_gate.1} parent=43 // pred_fallthru
          _
        // Predicated region
        $region49: #{gru_gate.1} parent=43 // pred_check
          %p252 = pneg %p108
        $region50: #{gru_gate.1} parent=43 // pred_check_branch
          %254 = sbr.rel (%p252) target = $region52
        $region51: #{gru_gate.1} parent=43 // pred_region
          %255 = dma.done [#allocation5], 2048
        $region52: #{gru_gate.1} parent=43 // pred_fallthru
          _
        %p256 = scmp.lt.s32.totalorder %s19, 1
        %s257 = scalar_select %p256, %s19, 1
        %s258 = smul.addr %s257, 8
        %s259 = scalar_lea.vmem %s0, %s258
        %p260 = pneg %p40
        %p261 = pneg %p37
        %p262 = scmp.lt.s32.totalorder %s19, 1
        %s263 = scalar_select %p262, %s19, 1
        %s264 = smul.addr %s263, 8
        %s265 = scalar_lea.vmem %s1, %s264
        %p266 = pneg %p66
        %p267 = pneg %p63
        %p268 = pneg %p87
        %p269 = pneg %p84
        %p270 = pneg %p108
        %p271 = pneg %p105
        %p272 = pneg %p129
        %p273 = pneg %p126
        %p274 = pneg %p150
        %p275 = pneg %p147
        %p276 = pneg %p176
        %p277 = pneg %p173
        %p278 = scmp.lt.s32.totalorder %s19, 1
        %s279 = scalar_select %p278, %s19, 1
        %s280 = smul.addr %s279, 8
        %s281 = scalar_lea.vmem %s6, %s280
        %p282 = scmp.lt.s32.totalorder %s19, 1
        %s283 = scalar_select %p282, %s19, 1
        %s284 = smul.addr %s283, 8
        %s285 = scalar_lea.vmem %s0, %s284
        %p286 = scmp.lt.s32.totalorder %s19, 1
        %s287 = scalar_select %p286, %s19, 1
        %s288 = smul.addr %s287, 8
        %s289 = scalar_lea.vmem %s1, %s288
        %p290 = scmp.lt.s32.totalorder %s19, 1
        %s291 = scalar_select %p290, %s19, 1
        %s292 = smul.addr %s291, 8
        %s293 = scalar_lea.vmem %s6, %s292
        %v295 = vld [vmem:[%s285] sm:$0xff]
        %v296 = vpack.c.bf16 %v295, %v295
        %v297 = vld [vmem:[%s289] sm:$0xff]
        %v298 = vpack.c.bf16 %v297, %v297
        %v299 = vld [vmem:[#allocation2] sm:$0xff]
        %v300 = vld [vmem:[#allocation2 + $0x8] sm:$0xf]
        %v301 = vld [vmem:[#allocation2 + $0xc] sm:$0xff]
        %v302 = vld [vmem:[#allocation2 + $0x14] sm:$0xf]
        %v303 = vld [vmem:[#allocation2 + $0x18] sm:$0xff]
        %v304 = vld [vmem:[#allocation2 + $0x20] sm:$0xf]
        %v305 = vld [vmem:[#allocation2 + $0x24] sm:$0xff]
        %v306 = vld [vmem:[#allocation2 + $0x2c] sm:$0xf]
        %v307 = vld [vmem:[#allocation2 + $0x30] sm:$0xff]
        %v308 = vld [vmem:[#allocation2 + $0x38] sm:$0xf]
        %v309 = vld [vmem:[#allocation2 + $0x3c] sm:$0xff]
        %v310 = vld [vmem:[#allocation2 + $0x44] sm:$0xf]
        %v311 = vld [vmem:[#allocation2 + $0x48] sm:$0xff]
        %v312 = vld [vmem:[#allocation2 + $0x50] sm:$0xf]
        %v313 = vld [vmem:[#allocation2 + $0x54] sm:$0xff]
        %v314 = vld [vmem:[#allocation2 + $0x5c] sm:$0xf]
        %v315 = vld [vmem:[#allocation2 + $0x60] sm:$0xff]
        %v316 = vld [vmem:[#allocation2 + $0x68] sm:$0xf]
        %v317 = vld [vmem:[#allocation2 + $0x6c] sm:$0xff]
        %v318 = vld [vmem:[#allocation2 + $0x74] sm:$0xf]
        %v319 = vld [vmem:[#allocation2 + $0x78] sm:$0xff]
        %v320 = vld [vmem:[#allocation2 + $0x80] sm:$0xf]
        %v321 = vld [vmem:[#allocation2 + $0x84] sm:$0xff]
        %v322 = vld [vmem:[#allocation2 + $0x8c] sm:$0xf]
        %v323 = vld [vmem:[#allocation2 + $0x90] sm:$0xff]
        %v324 = vld [vmem:[#allocation2 + $0x98] sm:$0xf]
        %v325 = vld [vmem:[#allocation2 + $0x9c] sm:$0xff]
        %v326 = vld [vmem:[#allocation2 + $0xa4] sm:$0xf]
        %v327 = vld [vmem:[#allocation2 + $0xa8] sm:$0xff]
        %v328 = vld [vmem:[#allocation2 + $0xb0] sm:$0xf]
        %v329 = vld [vmem:[#allocation2 + $0xb4] sm:$0xff]
        %v330 = vld [vmem:[#allocation2 + $0xbc] sm:$0xf]
        %v363 = vunpack.c.l.b16 %v299
        %v364 = vunpack.c.h.b16 %v299
        %v365 = vunpack.c.l.b16 %v300
        %v366 = vunpack.c.l.b16 %v301
        %v367 = vunpack.c.h.b16 %v301
        %v368 = vunpack.c.l.b16 %v302
        %v369 = vunpack.c.l.b16 %v303
        %v370 = vunpack.c.h.b16 %v303
        %v371 = vunpack.c.l.b16 %v304
        %v372 = vunpack.c.l.b16 %v305
        %v373 = vunpack.c.h.b16 %v305
        %v374 = vunpack.c.l.b16 %v306
        %v375 = vunpack.c.l.b16 %v307
        %v376 = vunpack.c.h.b16 %v307
        %v377 = vunpack.c.l.b16 %v308
        %v378 = vunpack.c.l.b16 %v309
        %v379 = vunpack.c.h.b16 %v309
        %v380 = vunpack.c.l.b16 %v310
        %v381 = vunpack.c.l.b16 %v311
        %v382 = vunpack.c.h.b16 %v311
        %v383 = vunpack.c.l.b16 %v312
        %v384 = vunpack.c.l.b16 %v313
        %v385 = vunpack.c.h.b16 %v313
        %v386 = vunpack.c.l.b16 %v314
        %v387 = vunpack.c.l.b16 %v315
        %v388 = vunpack.c.h.b16 %v315
        %v389 = vunpack.c.l.b16 %v316
        %v390 = vunpack.c.l.b16 %v317
        %v391 = vunpack.c.h.b16 %v317
        %v392 = vunpack.c.l.b16 %v318
        %v393 = vunpack.c.l.b16 %v319
        %v394 = vunpack.c.h.b16 %v319
        %v395 = vunpack.c.l.b16 %v320
        %v396 = vunpack.c.l.b16 %v321
        %v397 = vunpack.c.h.b16 %v321
        %v398 = vunpack.c.l.b16 %v322
        %v399 = vunpack.c.l.b16 %v323
        %v400 = vunpack.c.h.b16 %v323
        %v401 = vunpack.c.l.b16 %v324
        %v402 = vunpack.c.l.b16 %v325
        %v403 = vunpack.c.h.b16 %v325
        %v404 = vunpack.c.l.b16 %v326
        %v405 = vunpack.c.l.b16 %v327
        %v406 = vunpack.c.h.b16 %v327
        %v407 = vunpack.c.l.b16 %v328
        %v408 = vunpack.c.l.b16 %v329
        %v409 = vunpack.c.h.b16 %v329
        %v410 = vunpack.c.l.b16 %v330
        %v411 = vpack.c.b16 %v366, %v363
        %v412 = vpack.c.b16 %v367, %v364
        %v413 = vpack.c.b16 %v368, %v365
        %v414 = vpack.c.b16 %v372, %v369
        %v415 = vpack.c.b16 %v373, %v370
        %v416 = vpack.c.b16 %v374, %v371
        %v417 = vpack.c.b16 %v378, %v375
        %v418 = vpack.c.b16 %v379, %v376
        %v419 = vpack.c.b16 %v380, %v377
        %v420 = vpack.c.b16 %v384, %v381
        %v421 = vpack.c.b16 %v385, %v382
        %v422 = vpack.c.b16 %v386, %v383
        %v423 = vpack.c.b16 %v390, %v387
        %v424 = vpack.c.b16 %v391, %v388
        %v425 = vpack.c.b16 %v392, %v389
        %v426 = vpack.c.b16 %v396, %v393
        %v427 = vpack.c.b16 %v397, %v394
        %v428 = vpack.c.b16 %v398, %v395
        %v429 = vpack.c.b16 %v402, %v399
        %v430 = vpack.c.b16 %v403, %v400
        %v431 = vpack.c.b16 %v404, %v401
        %v432 = vpack.c.b16 %v408, %v405
        %v433 = vpack.c.b16 %v409, %v406
        %v434 = vpack.c.b16 %v410, %v407
        %459 = vmatprep.subr.bf16.mxu0 %v433
        %460 = vmatpush1.bf16.msra.mxu0 %v432
        %461 = vmatprep.subr.bf16.mxu0 %v430
        %462 = vmatpush1.bf16.msra.mxu0 %v429
        %463 = vmatprep.subr.bf16.mxu0 %v427
        %464 = vmatpush1.bf16.msra.mxu0 %v426
        %465 = vmatprep.subr.bf16.mxu0 %v424
        %466 = vmatpush1.bf16.msra.mxu0 %v423
        %467 = vmatprep.subr.bf16.mxu0 %v421
        %468 = vmatpush1.bf16.msra.mxu0 %v420
        %469 = vmatprep.subr.bf16.mxu0 %v418
        %470 = vmatpush1.bf16.msra.mxu0 %v417
        %471 = vmatprep.subr.bf16.mxu0 %v415
        %472 = vmatpush1.bf16.msra.mxu0 %v414
        %473 = vmatprep.subr.bf16.mxu0 %v412
        %474 = vmatpush1.bf16.msra.mxu0 %v411
        %475 = vmatprep.subr.bf16.mxu0 0
        %476 = vmatpush2.bf16.msra.mxu0 0
        %477 = vmatprep.subr.bf16.mxu0 0
        %478 = vmatpush2.bf16.msra.mxu0 0
        %479 = vmatprep.subr.bf16.mxu0 0
        %480 = vmatpush2.bf16.msra.mxu0 0
        %481 = vmatprep.subr.bf16.mxu0 0
        %482 = vmatpush2.bf16.msra.mxu0 0
        %483 = vmatprep.subr.bf16.mxu0 0
        %484 = vmatpush2.bf16.msra.mxu0 0
        %485 = vmatprep.subr.bf16.mxu0 0
        %486 = vmatpush2.bf16.msra.mxu0 0
        %487 = vmatprep.subr.bf16.mxu0 0
        %488 = vmatpush2.bf16.msra.mxu0 0
        %489 = vmatprep.subr.bf16.mxu0 0
        %490 = vmatpush2.bf16.msra.mxu0 0
        %491 = vmatprep.mubr.bf16.mxu0 0
        %492 = vmatmul.mubr.bf16.gmra.mxu0 %v298
        %v493 = vpop.f32.mrf.mxu0
        %v494 = vadd.f32 0.0, %v493
        %v495 = vpop.f32.mrf.mxu0
        %v496 = vadd.f32 0.0, %v495
        %v497 = vpop.f32.mrf.mxu0
        %v498 = vpop.f32.mrf.mxu0
        %499 = vdwg.mxu0
        %500 = vmatprep.subr.bf16.mxu0 0
        %501 = vmatpush1.bf16.msra.mxu0 %v434
        %502 = vmatprep.subr.bf16.mxu0 0
        %503 = vmatpush1.bf16.msra.mxu0 %v431
        %504 = vmatprep.subr.bf16.mxu0 0
        %505 = vmatpush1.bf16.msra.mxu0 %v428
        %506 = vmatprep.subr.bf16.mxu0 0
        %507 = vmatpush1.bf16.msra.mxu0 %v425
        %508 = vmatprep.subr.bf16.mxu0 0
        %509 = vmatpush1.bf16.msra.mxu0 %v422
        %510 = vmatprep.subr.bf16.mxu0 0
        %511 = vmatpush1.bf16.msra.mxu0 %v419
        %512 = vmatprep.subr.bf16.mxu0 0
        %513 = vmatpush1.bf16.msra.mxu0 %v416
        %514 = vmatprep.subr.bf16.mxu0 0
        %515 = vmatpush1.bf16.msra.mxu0 %v413
        %516 = vmatprep.subr.bf16.mxu0 0
        %517 = vmatpush2.bf16.msra.mxu0 0
        %518 = vmatprep.subr.bf16.mxu0 0
        %519 = vmatpush2.bf16.msra.mxu0 0
        %520 = vmatprep.subr.bf16.mxu0 0
        %521 = vmatpush2.bf16.msra.mxu0 0
        %522 = vmatprep.subr.bf16.mxu0 0
        %523 = vmatpush2.bf16.msra.mxu0 0
        %524 = vmatprep.subr.bf16.mxu0 0
        %525 = vmatpush2.bf16.msra.mxu0 0
        %526 = vmatprep.subr.bf16.mxu0 0
        %527 = vmatpush2.bf16.msra.mxu0 0
        %528 = vmatprep.subr.bf16.mxu0 0
        %529 = vmatpush2.bf16.msra.mxu0 0
        %530 = vmatprep.subr.bf16.mxu0 0
        %531 = vmatpush2.bf16.msra.mxu0 0
        %532 = vmatprep.mubr.bf16.mxu0 0
        %533 = vmatmul.mubr.bf16.gmra.mxu0 %v298
        %v534 = vpop.f32.mrf.mxu0
        %v535 = vadd.f32 0.0, %v534
        %v536 = vpop.f32.mrf.mxu0
        %v537 = vpop.f32.mrf.mxu0
        %v538 = vpop.f32.mrf.mxu0
        %539 = vdwg.mxu0
        %v540 = vld [vmem:[#allocation4] sm:$0xff]
        %v541 = vld [vmem:[#allocation4 + $0x8] sm:$0xff]
        %v542 = vld [vmem:[#allocation4 + $0x10] sm:$0xff]
        %v543 = vld [vmem:[#allocation4 + $0x18] sm:$0xff]
        %v544 = vld [vmem:[#allocation4 + $0x20] sm:$0xff]
        %v545 = vld [vmem:[#allocation4 + $0x28] sm:$0xff]
        %v546 = vld [vmem:[#allocation4 + $0x30] sm:$0xff]
        %v547 = vld [vmem:[#allocation4 + $0x38] sm:$0xff]
        %v548 = vld [vmem:[#allocation4 + $0x40] sm:$0xff]
        %v549 = vld [vmem:[#allocation4 + $0x48] sm:$0xff]
        %v550 = vld [vmem:[#allocation4 + $0x50] sm:$0xff]
        %v551 = vld [vmem:[#allocation4 + $0x58] sm:$0xff]
        %v552 = vld [vmem:[#allocation4 + $0x60] sm:$0xff]
        %v553 = vld [vmem:[#allocation4 + $0x68] sm:$0xff]
        %v554 = vld [vmem:[#allocation4 + $0x70] sm:$0xff]
        %v555 = vld [vmem:[#allocation4 + $0x78] sm:$0xff]
        %v572 = vunpack.c.l.b16 %v540
        %v573 = vunpack.c.h.b16 %v540
        %v574 = vunpack.c.l.b16 %v541
        %v575 = vunpack.c.h.b16 %v541
        %v576 = vunpack.c.l.b16 %v542
        %v577 = vunpack.c.h.b16 %v542
        %v578 = vunpack.c.l.b16 %v543
        %v579 = vunpack.c.h.b16 %v543
        %v580 = vunpack.c.l.b16 %v544
        %v581 = vunpack.c.h.b16 %v544
        %v582 = vunpack.c.l.b16 %v545
        %v583 = vunpack.c.h.b16 %v545
        %v584 = vunpack.c.l.b16 %v546
        %v585 = vunpack.c.h.b16 %v546
        %v586 = vunpack.c.l.b16 %v547
        %v587 = vunpack.c.h.b16 %v547
        %v588 = vunpack.c.l.b16 %v548
        %v589 = vunpack.c.h.b16 %v548
        %v590 = vunpack.c.l.b16 %v549
        %v591 = vunpack.c.h.b16 %v549
        %v592 = vunpack.c.l.b16 %v550
        %v593 = vunpack.c.h.b16 %v550
        %v594 = vunpack.c.l.b16 %v551
        %v595 = vunpack.c.h.b16 %v551
        %v596 = vunpack.c.l.b16 %v552
        %v597 = vunpack.c.h.b16 %v552
        %v598 = vunpack.c.l.b16 %v553
        %v599 = vunpack.c.h.b16 %v553
        %v600 = vunpack.c.l.b16 %v554
        %v601 = vunpack.c.h.b16 %v554
        %v602 = vunpack.c.l.b16 %v555
        %v603 = vunpack.c.h.b16 %v555
        %v604 = vpack.c.b16 %v574, %v572
        %v605 = vpack.c.b16 %v575, %v573
        %v606 = vpack.c.b16 %v578, %v576
        %v607 = vpack.c.b16 %v579, %v577
        %v608 = vpack.c.b16 %v582, %v580
        %v609 = vpack.c.b16 %v583, %v581
        %v610 = vpack.c.b16 %v586, %v584
        %v611 = vpack.c.b16 %v587, %v585
        %v612 = vpack.c.b16 %v590, %v588
        %v613 = vpack.c.b16 %v591, %v589
        %v614 = vpack.c.b16 %v594, %v592
        %v615 = vpack.c.b16 %v595, %v593
        %v616 = vpack.c.b16 %v598, %v596
        %v617 = vpack.c.b16 %v599, %v597
        %v618 = vpack.c.b16 %v602, %v600
        %v619 = vpack.c.b16 %v603, %v601
        %636 = vmatprep.subr.bf16.mxu0 %v619
        %637 = vmatpush1.bf16.msra.mxu0 %v618
        %638 = vmatprep.subr.bf16.mxu0 %v617
        %639 = vmatpush1.bf16.msra.mxu0 %v616
        %640 = vmatprep.subr.bf16.mxu0 %v615
        %641 = vmatpush1.bf16.msra.mxu0 %v614
        %642 = vmatprep.subr.bf16.mxu0 %v613
        %643 = vmatpush1.bf16.msra.mxu0 %v612
        %644 = vmatprep.subr.bf16.mxu0 %v611
        %645 = vmatpush1.bf16.msra.mxu0 %v610
        %646 = vmatprep.subr.bf16.mxu0 %v609
        %647 = vmatpush1.bf16.msra.mxu0 %v608
        %648 = vmatprep.subr.bf16.mxu0 %v607
        %649 = vmatpush1.bf16.msra.mxu0 %v606
        %650 = vmatprep.subr.bf16.mxu0 %v605
        %651 = vmatpush1.bf16.msra.mxu0 %v604
        %652 = vmatprep.subr.bf16.mxu0 0
        %653 = vmatpush2.bf16.msra.mxu0 0
        %654 = vmatprep.subr.bf16.mxu0 0
        %655 = vmatpush2.bf16.msra.mxu0 0
        %656 = vmatprep.subr.bf16.mxu0 0
        %657 = vmatpush2.bf16.msra.mxu0 0
        %658 = vmatprep.subr.bf16.mxu0 0
        %659 = vmatpush2.bf16.msra.mxu0 0
        %660 = vmatprep.subr.bf16.mxu0 0
        %661 = vmatpush2.bf16.msra.mxu0 0
        %662 = vmatprep.subr.bf16.mxu0 0
        %663 = vmatpush2.bf16.msra.mxu0 0
        %664 = vmatprep.subr.bf16.mxu0 0
        %665 = vmatpush2.bf16.msra.mxu0 0
        %666 = vmatprep.subr.bf16.mxu0 0
        %667 = vmatpush2.bf16.msra.mxu0 0
        %668 = vmatprep.mubr.bf16.mxu0 0
        %669 = vmatmul.mubr.bf16.gmra.mxu0 %v296
        %v670 = vpop.f32.mrf.mxu0
        %v671 = vadd.f32 0.0, %v670
        %v672 = vpop.f32.mrf.mxu0
        %v673 = vadd.f32 0.0, %v672
        %v674 = vpop.f32.mrf.mxu0
        %v675 = vpop.f32.mrf.mxu0
        %676 = vdwg.mxu0
        %v677 = vld [vmem:[%s5] sm:$0x1]
        %v679 = vlaneseq
        %v680 = vshrl.u32 %v679, 7
        %v681 = vsub.s32 0, %v680
        %v682 = vrot.slane %v677, %v681
        %v684 = vadd.f32 %v494, %v682
        %v685 = vadd.f32 %v684, %v671
        %v686 = vxor.u32 %v685, 2147483648
        %v687 = vmul.f32 %v686, 1.442695
        %v688 = vpow.pop %v687
        %v689 = vadd.f32 %v688, 1.0
        %v690 = vrcp.pop %v689
        %v691 = vmul.f32 1.0, %v690
        %v692 = vadd.f32 %v496, %v673
        %v693 = vxor.u32 %v692, 2147483648
        %v694 = vmul.f32 %v693, 1.442695
        %v695 = vpow.pop %v694
        %v696 = vadd.f32 %v695, 1.0
        %v697 = vrcp.pop %v696
        %v698 = vmul.f32 1.0, %v697
        %v699 = vmul.f32 %v698, %v295
        %v700 = vpack.c.bf16 %v699, %v699
        %v701 = vld [vmem:[%s4] sm:$0xf]
        %v702 = vld [vmem:[%s4 + $0x4] sm:$0xf]
        %v703 = vld [vmem:[%s4 + $0x8] sm:$0xf]
        %v704 = vld [vmem:[%s4 + $0xc] sm:$0xf]
        %v705 = vld [vmem:[%s4 + $0x10] sm:$0xf]
        %v706 = vld [vmem:[%s4 + $0x14] sm:$0xf]
        %v707 = vld [vmem:[%s4 + $0x18] sm:$0xf]
        %v708 = vld [vmem:[%s4 + $0x1c] sm:$0xf]
        %v709 = vld [vmem:[%s4 + $0x20] sm:$0xf]
        %v710 = vld [vmem:[%s4 + $0x24] sm:$0xf]
        %v711 = vld [vmem:[%s4 + $0x28] sm:$0xf]
        %v712 = vld [vmem:[%s4 + $0x2c] sm:$0xf]
        %v713 = vld [vmem:[%s4 + $0x30] sm:$0xf]
        %v714 = vld [vmem:[%s4 + $0x34] sm:$0xf]
        %v715 = vld [vmem:[%s4 + $0x38] sm:$0xf]
        %v716 = vld [vmem:[%s4 + $0x3c] sm:$0xf]
        %v733 = vunpack.c.l.b16 %v701
        %v734 = vunpack.c.l.b16 %v702
        %v735 = vunpack.c.l.b16 %v703
        %v736 = vunpack.c.l.b16 %v704
        %v737 = vunpack.c.l.b16 %v705
        %v738 = vunpack.c.l.b16 %v706
        %v739 = vunpack.c.l.b16 %v707
        %v740 = vunpack.c.l.b16 %v708
        %v741 = vunpack.c.l.b16 %v709
        %v742 = vunpack.c.l.b16 %v710
        %v743 = vunpack.c.l.b16 %v711
        %v744 = vunpack.c.l.b16 %v712
        %v745 = vunpack.c.l.b16 %v713
        %v746 = vunpack.c.l.b16 %v714
        %v747 = vunpack.c.l.b16 %v715
        %v748 = vunpack.c.l.b16 %v716
        %v749 = vpack.c.b16 %v734, %v733
        %v750 = vpack.c.b16 %v736, %v735
        %v751 = vpack.c.b16 %v738, %v737
        %v752 = vpack.c.b16 %v740, %v739
        %v753 = vpack.c.b16 %v742, %v741
        %v754 = vpack.c.b16 %v744, %v743
        %v755 = vpack.c.b16 %v746, %v745
        %v756 = vpack.c.b16 %v748, %v747
        %765 = vmatprep.subr.bf16.mxu0 0
        %766 = vmatpush1.bf16.msra.mxu0 %v756
        %767 = vmatprep.subr.bf16.mxu0 0
        %768 = vmatpush1.bf16.msra.mxu0 %v755
        %769 = vmatprep.subr.bf16.mxu0 0
        %770 = vmatpush1.bf16.msra.mxu0 %v754
        %771 = vmatprep.subr.bf16.mxu0 0
        %772 = vmatpush1.bf16.msra.mxu0 %v753
        %773 = vmatprep.subr.bf16.mxu0 0
        %774 = vmatpush1.bf16.msra.mxu0 %v752
        %775 = vmatprep.subr.bf16.mxu0 0
        %776 = vmatpush1.bf16.msra.mxu0 %v751
        %777 = vmatprep.subr.bf16.mxu0 0
        %778 = vmatpush1.bf16.msra.mxu0 %v750
        %779 = vmatprep.subr.bf16.mxu0 0
        %780 = vmatpush1.bf16.msra.mxu0 %v749
        %781 = vmatprep.subr.bf16.mxu0 0
        %782 = vmatpush2.bf16.msra.mxu0 0
        %783 = vmatprep.subr.bf16.mxu0 0
        %784 = vmatpush2.bf16.msra.mxu0 0
        %785 = vmatprep.subr.bf16.mxu0 0
        %786 = vmatpush2.bf16.msra.mxu0 0
        %787 = vmatprep.subr.bf16.mxu0 0
        %788 = vmatpush2.bf16.msra.mxu0 0
        %789 = vmatprep.subr.bf16.mxu0 0
        %790 = vmatpush2.bf16.msra.mxu0 0
        %791 = vmatprep.subr.bf16.mxu0 0
        %792 = vmatpush2.bf16.msra.mxu0 0
        %793 = vmatprep.subr.bf16.mxu0 0
        %794 = vmatpush2.bf16.msra.mxu0 0
        %795 = vmatprep.subr.bf16.mxu0 0
        %796 = vmatpush2.bf16.msra.mxu0 0
        %797 = vmatprep.mubr.bf16.mxu0 0
        %798 = vmatmul.mubr.bf16.gmra.mxu0 %v700
        %v799 = vpop.f32.mrf.mxu0
        %v800 = vadd.f32 0.0, %v799
        %v801 = vpop.f32.mrf.mxu0
        %v802 = vpop.f32.mrf.mxu0
        %v803 = vpop.f32.mrf.mxu0
        %804 = vdwg.mxu0
        %v805 = vadd.f32 %v535, %v800
        %v806 = vtanh.pop %v805
        %v807 = vsub.f32 %v806, %v295
        %v808 = vmul.f32 %v691, %v807
        %v809 = vadd.f32 %v295, %v808
        %810 = vst [vmem:[%s293] sm:$0xff] %v809
        %p811 = scmp.lt.s32.totalorder %s19, 1
        %s812 = scalar_select %p811, %s19, 1
        %s813 = smul.addr %s812, 8
        %s814 = scalar_lea.vmem %s6, %s813
        // Predicated region
        $region53: #{gru_gate.1} parent=43 // pred_check
          %p815 = pneg %p173
        $region54: #{gru_gate.1} parent=43 // pred_check_branch
          %817 = sbr.rel (%p815) target = $region56
        $region55: #{gru_gate.1} parent=43 // pred_region
          _
        $region56: #{gru_gate.1} parent=43 // pred_fallthru
          _
      $region44: #{gru_gate.1} parent=5 // pred_fallthru
        _
      %p818 = scmp.le.s32.totalorder 2, %s14
      // Predicated region
      $region57: #{gru_gate.1} parent=5 // pred_check
        %p819 = pneg %p818
      $region58: #{gru_gate.1} parent=5 // pred_check_branch
        %821 = sbr.rel (%p819) target = $region60
      $region59: #{gru_gate.1} parent=5 // pred_region
        %s822 = ssub.s32 %s14, 2
        // Predicated region
        $region61: #{gru_gate.1} parent=59 // pred_check
          %p823 = pneg %p179
        $region62: #{gru_gate.1} parent=59 // pred_check_branch
          %825 = sbr.rel (%p823) target = $region64
        $region63: #{gru_gate.1} parent=59 // pred_region
          %p826 = scmp.lt.s32.totalorder %s20, 1
          %s827 = scalar_select %p826, %s20, 1
          %s828 = smul.addr %s827, 8
          %s829 = scalar_lea.vmem %s6, %s828
        $region64: #{gru_gate.1} parent=59 // pred_fallthru
          _
      $region60: #{gru_gate.1} parent=5 // pred_fallthru
        _
    $region6: #{gru_gate.1} parent=1 // loop_footer
      %s18 = sadd.s32 1, %s14
    $region7: #{gru_gate.1} parent=1 // loop_footer_branch
      %13 = sbr.rel target = $region3
    $region8: #{gru_gate.1} parent=1 // loop_exit
      _
    %830 = vsyncpa [#allocation3], 1
    %s831 = scalar_lea.sflag [#allocation3], 1
    %832 = vsyncpa %s831, 1
    %833 = vsyncpa [#allocation5], 1

// kernel: gru_gate.1
$region0: #{gru_gate.1}
  #allocation0 [shape = 'u32[]', space=smem, size = 0x4, offset = 0x4, fixed_abs, tag = 'smem constant byte address 0x4 - core index']
  #allocation1 [shape = 'u32[144,128]{1,0:T(1,128)}', space=vmem, size = 0x12000, scoped, tag = 'internal scratch']
  %s0 = inlined_call_operand.vmem [shape: f32[16,128], index: 0, kind: input, shape index: {}]
  %s1 = inlined_call_operand.vmem [shape: f32[16,128], index: 1, kind: input, shape index: {}]
  %s2 = inlined_call_operand.hbm [shape: bf16[128,384], index: 2, kind: input, shape index: {}]
  %s3 = inlined_call_operand.hbm [shape: bf16[128,256], index: 3, kind: input, shape index: {}]
  %s4 = inlined_call_operand.vmem [shape: bf16[128,128], index: 4, kind: input, shape index: {}]
  %s5 = inlined_call_operand.vmem [shape: f32[1,128], index: 5, kind: input, shape index: {}]
  %s6 = inlined_call_operand.vmem [shape: f32[16,128], index: 6, kind: output, shape index: {}]
  %s7 = sld [smem:[#allocation0]]
  $region65: #{gru_gate.1} parent=0
    _
  %s9 = ssub.s32 1, %s7
  %s10 = scalar_select 0, %s9, %s7
  $region1: #{gru_gate.1} parent=0
    #allocation2 [shape = 'u8[98304]{0}', space=vmem, size = 0x18000, scoped, tag = 'input window, operand 2, single buffered']
    #allocation3 [shape = 's32[2]{0}', space=sflag, size = 0x8, scoped, tag = 'scoped memory for gru_gate.1']
    #allocation4 [shape = 'u8[65536]{0}', space=vmem, size = 0x10000, scoped, tag = 'input window, operand 3, single buffered']
    #allocation5 [shape = 's32[1]{0}', space=sflag, size = 0x4, scoped, tag = 'scoped memory for gru_gate.1']
    %11 = vsyncpa [#allocation3], 0
    %12 = vsyncpa [#allocation5], 0
    loop: start=0, step=1, limit=4
    $region2: #{gru_gate.1} parent=1 // loop_pre_header
      _
    $region3: #{gru_gate.1} parent=1 // loop_header
      %s14 = sphi 0, %s18
      %p15 = scmp.ge.s32.totalorder %s14, 4
      %s24 = sphi 0, %s26
      %s27 = sphi 0, %s24
      %s28 = sphi 0, %s27
      %s44 = sphi 0, %s28
      %s50 = sphi 0, %s52
      %s53 = sphi 0, %s50
      %s54 = sphi 0, %s53
      %s70 = sphi 0, %s54
      %s74 = sphi 0, %s74
      %s76 = sphi 0, %s74
      %s77 = sphi 0, %s76
      %s91 = sphi 0, %s77
      %s95 = sphi 0, %s95
      %s97 = sphi 0, %s95
      %s98 = sphi 0, %s97
      %s112 = sphi 0, %s98
      %s116 = sphi 0, %s116
      %s118 = sphi 0, %s116
      %s119 = sphi 0, %s118
      %s133 = sphi 0, %s119
      %s137 = sphi 0, %s137
      %s139 = sphi 0, %s137
      %s140 = sphi 0, %s139
      %s154 = sphi 0, %s140
      %s160 = sphi 0, %s162
      %s163 = sphi 0, %s160
      %s164 = sphi 0, %s163
      %s180 = sphi 0, %s164
    $region4: #{gru_gate.1} parent=1 // loop_header_branch
      %17 = sbr.rel (%p15) target = $region8
    $region5: #{gru_gate.1} parent=1 // loop_body
      %s19 = ssub.s32 %s14, 1
      %s20 = ssub.s32 %s14, 2
      %s21 = sadd.s32 %s14, 1
      %s22 = ssub.s32 %s14, %s21
      %p23 = scmp.eq.s32.totalorder %s22, 0
      %s25 = sadd.s32 %s24, 1
      %s26 = scalar_select %p23, %s24, %s25
      %p29 = pneg %p23
      %p30 = scmp.eq.s32.totalorder %s14, 1
      %p31 = por %p29, %p30
      %p32 = scmp.ne.s32.totalorder %s24, %s27
      %p33 = scmp.eq.s32.totalorder %s14, 0
      %p34 = por %p32, %p33
      %p35 = scmp.ne.s32.totalorder %s24, %s27
      %p36 = scmp.eq.s32.totalorder %s19, 1
      %p37 = por %p35, %p36
      %p38 = scmp.ne.s32.totalorder %s27, %s28
      %p39 = scmp.eq.s32.totalorder %s19, 0
      %p40 = por %p38, %p39
      %p41 = scmp.ne.s32.totalorder %s27, %s28
      %p42 = scmp.eq.s32.totalorder %s20, 1
      %p43 = por %p41, %p42
      %p45 = scmp.ne.s32.totalorder %s28, %s44
      %p46 = scmp.eq.s32.totalorder %s20, 0
      %p47 = por %p45, %p46
      %s48 = ssub.s32 %s14, %s21
      %p49 = scmp.eq.s32.totalorder %s48, 0
      %s51 = sadd.s32 %s50, 1
      %s52 = scalar_select %p49, %s50, %s51
      %p55 = pneg %p49
      %p56 = scmp.eq.s32.totalorder %s14, 1
      %p57 = por %p55, %p56
      %p58 = scmp.ne.s32.totalorder %s50, %s53
      %p59 = scmp.eq.s32.totalorder %s14, 0
      %p60 = por %p58, %p59
      %p61 = scmp.ne.s32.totalorder %s50, %s53
      %p62 = scmp.eq.s32.totalorder %s19, 1
      %p63 = por %p61, %p62
      %p64 = scmp.ne.s32.totalorder %s53, %s54
      %p65 = scmp.eq.s32.totalorder %s19, 0
      %p66 = por %p64, %p65
      %p67 = scmp.ne.s32.totalorder %s53, %s54
      %p68 = scmp.eq.s32.totalorder %s20, 1
      %p69 = por %p67, %p68
      %p71 = scmp.ne.s32.totalorder %s54, %s70
      %p72 = scmp.eq.s32.totalorder %s20, 0
      %p73 = por %p71, %p72
      %s75 = sadd.s32 %s74, 1
      %p78 = scmp.eq.s32.totalorder %s14, 1
      %p79 = scmp.ne.s32.totalorder %s74, %s76
      %p80 = scmp.eq.s32.totalorder %s14, 0
      %p81 = por %p79, %p80
      %p82 = scmp.ne.s32.totalorder %s74, %s76
      %p83 = scmp.eq.s32.totalorder %s19, 1
      %p84 = por %p82, %p83
      %p85 = scmp.ne.s32.totalorder %s76, %s77
      %p86 = scmp.eq.s32.totalorder %s19, 0
      %p87 = por %p85, %p86
      %p88 = scmp.ne.s32.totalorder %s76, %s77
      %p89 = scmp.eq.s32.totalorder %s20, 1
      %p90 = por %p88, %p89
      %p92 = scmp.ne.s32.totalorder %s77, %s91
      %p93 = scmp.eq.s32.totalorder %s20, 0
      %p94 = por %p92, %p93
      %s96 = sadd.s32 %s95, 1
      %p99 = scmp.eq.s32.totalorder %s14, 1
      %p100 = scmp.ne.s32.totalorder %s95, %s97
      %p101 = scmp.eq.s32.totalorder %s14, 0
      %p102 = por %p100, %p101
      %p103 = scmp.ne.s32.totalorder %s95, %s97
      %p104 = scmp.eq.s32.totalorder %s19, 1
      %p105 = por %p103, %p104
      %p106 = scmp.ne.s32.totalorder %s97, %s98
      %p107 = scmp.eq.s32.totalorder %s19, 0
      %p108 = por %p106, %p107
      %p109 = scmp.ne.s32.totalorder %s97, %s98
      %p110 = scmp.eq.s32.totalorder %s20, 1
      %p111 = por %p109, %p110
      %p113 = scmp.ne.s32.totalorder %s98, %s112
      %p114 = scmp.eq.s32.totalorder %s20, 0
      %p115 = por %p113, %p114
      %s117 = sadd.s32 %s116, 1
      %p120 = scmp.eq.s32.totalorder %s14, 1
      %p121 = scmp.ne.s32.totalorder %s116, %s118
      %p122 = scmp.eq.s32.totalorder %s14, 0
      %p123 = por %p121, %p122
      %p124 = scmp.ne.s32.totalorder %s116, %s118
      %p125 = scmp.eq.s32.totalorder %s19, 1
      %p126 = por %p124, %p125
      %p127 = scmp.ne.s32.totalorder %s118, %s119
      %p128 = scmp.eq.s32.totalorder %s19, 0
      %p129 = por %p127, %p128
      %p130 = scmp.ne.s32.totalorder %s118, %s119
      %p131 = scmp.eq.s32.totalorder %s20, 1
      %p132 = por %p130, %p131
      %p134 = scmp.ne.s32.totalorder %s119, %s133
      %p135 = scmp.eq.s32.totalorder %s20, 0
      %p136 = por %p134, %p135
      %s138 = sadd.s32 %s137, 1
      %p141 = scmp.eq.s32.totalorder %s14, 1
      %p142 = scmp.ne.s32.totalorder %s137, %s139
      %p143 = scmp.eq.s32.totalorder %s14, 0
      %p144 = por %p142, %p143
      %p145 = scmp.ne.s32.totalorder %s137, %s139
      %p146 = scmp.eq.s32.totalorder %s19, 1
      %p147 = por %p145, %p146
      %p148 = scmp.ne.s32.totalorder %s139, %s140
      %p149 = scmp.eq.s32.totalorder %s19, 0
      %p150 = por %p148, %p149
      %p151 = scmp.ne.s32.totalorder %s139, %s140
      %p152 = scmp.eq.s32.totalorder %s20, 1
      %p153 = por %p151, %p152
      %p155 = scmp.ne.s32.totalorder %s140, %s154
      %p156 = scmp.eq.s32.totalorder %s20, 0
      %p157 = por %p155, %p156
      %s158 = ssub.s32 %s14, %s21
      %p159 = scmp.eq.s32.totalorder %s158, 0
      %s161 = sadd.s32 %s160, 1
      %s162 = scalar_select %p159, %s160, %s161
      %p165 = pneg %p159
      %p166 = scmp.eq.s32.totalorder %s14, 1
      %p167 = por %p165, %p166
      %p168 = scmp.ne.s32.totalorder %s160, %s163
      %p169 = scmp.eq.s32.totalorder %s14, 0
      %p170 = por %p168, %p169
      %p171 = scmp.ne.s32.totalorder %s160, %s163
      %p172 = scmp.eq.s32.totalorder %s19, 1
      %p173 = por %p171, %p172
      %p174 = scmp.ne.s32.totalorder %s163, %s164
      %p175 = scmp.eq.s32.totalorder %s19, 0
      %p176 = por %p174, %p175
      %p177 = scmp.ne.s32.totalorder %s163, %s164
      %p178 = scmp.eq.s32.totalorder %s20, 1
      %p179 = por %p177, %p178
      %p181 = scmp.ne.s32.totalorder %s164, %s180
      %p182 = scmp.eq.s32.totalorder %s20, 0
      %p183 = por %p181, %p182
      %p184 = scmp.le.s32.totalorder 1, %s14
      %p185 = scmp.lt.s32.totalorder %s14, 3
      %p186 = pnand %p184, %p185
      %p187 = pneg %p186
      // Predicated region
      $region9: #{gru_gate.1} parent=5 // pred_check
        _
      $region10: #{gru_gate.1} parent=5 // pred_check_branch
        %189 = sbr.rel (%p186) target = $region12
      $region11: #{gru_gate.1} parent=5 // pred_region
        %s190 = ssub.s32 %s14, 1
        // Predicated region
        $region13: #{gru_gate.1} parent=11 // pred_check
          %p191 = pneg %p87
        $region14: #{gru_gate.1} parent=11 // pred_check_branch
          %193 = sbr.rel (%p191) target = $region16
        $region15: #{gru_gate.1} parent=11 // pred_region
          %s195 = ssub.s32 3072, 3072
          %196 = vsyncadd [#allocation3], %s195
          %s197 = sshll.u32 [#allocation2], 4
          %s198 = int_to_ptr.vmem [resolvable:$true] %s197
          %203 = dma.hbm_to_vmem [thread:$0]  %s2, 3072, %s198, [#allocation3], 192, 192, 12
        $region16: #{gru_gate.1} parent=11 // pred_fallthru
          _
        // Predicated region
        $region17: #{gru_gate.1} parent=11 // pred_check
          %p204 = pneg %p108
        $region18: #{gru_gate.1} parent=11 // pred_check_branch
          %206 = sbr.rel (%p204) target = $region20
        $region19: #{gru_gate.1} parent=11 // pred_region
          %s208 = ssub.s32 2048, 2048
          %209 = vsyncadd [#allocation5], %s208
          %s210 = sshll.u32 [#allocation4], 4
          %s211 = int_to_ptr.vmem [resolvable:$true] %s210
          %216 = dma.hbm_to_vmem [thread:$0]  %s3, 2048, %s211, [#allocation5], 128, 128, 8
        $region20: #{gru_gate.1} parent=11 // pred_fallthru
          _
        // Predicated region
        $region21: #{gru_gate.1} parent=11 // pred_check
          %p217 = pneg %p129
        $region22: #{gru_gate.1} parent=11 // pred_check_branch
          %219 = sbr.rel (%p217) target = $region24
        $region23: #{gru_gate.1} parent=11 // pred_region
          _
        $region24: #{gru_gate.1} parent=11 // pred_fallthru
          _
        // Predicated region
        $region25: #{gru_gate.1} parent=11 // pred_check
          %p220 = pneg %p150
        $region26: #{gru_gate.1} parent=11 // pred_check_branch
          %222 = sbr.rel (%p220) target = $region28
        $region27: #{gru_gate.1} parent=11 // pred_region
          _
        $region28: #{gru_gate.1} parent=11 // pred_fallthru
          _
      $region12: #{gru_gate.1} parent=5 // pred_fallthru
        _
      %p223 = scmp.lt.s32.totalorder %s14, 2
      // Predicated region
      $region29: #{gru_gate.1} parent=5 // pred_check
        %p224 = pneg %p223
      $region30: #{gru_gate.1} parent=5 // pred_check_branch
        %226 = sbr.rel (%p224) target = $region32
      $region31: #{gru_gate.1} parent=5 // pred_region
        // Predicated region
        $region33: #{gru_gate.1} parent=31 // pred_check
          %p227 = pneg %p34
        $region34: #{gru_gate.1} parent=31 // pred_check_branch
          %229 = sbr.rel (%p227) target = $region36
        $region35: #{gru_gate.1} parent=31 // pred_region
          %p230 = scmp.lt.s32.totalorder %s14, 1
          %s231 = scalar_select %p230, %s14, 1
          %s232 = smul.addr %s231, 8
          %s233 = scalar_lea.vmem %s0, %s232
        $region36: #{gru_gate.1} parent=31 // pred_fallthru
          _
        // Predicated region
        $region37: #{gru_gate.1} parent=31 // pred_check
          %p234 = pneg %p60
        $region38: #{gru_gate.1} parent=31 // pred_check_branch
          %236 = sbr.rel (%p234) target = $region40
        $region39: #{gru_gate.1} parent=31 // pred_region
          %p237 = scmp.lt.s32.totalorder %s14, 1
          %s238 = scalar_select %p237, %s14, 1
          %s239 = smul.addr %s238, 8
          %s240 = scalar_lea.vmem %s1, %s239
        $region40: #{gru_gate.1} parent=31 // pred_fallthru
          _
      $region32: #{gru_gate.1} parent=5 // pred_fallthru
        _
      %p241 = scmp.le.s32.totalorder 1, %s14
      %p242 = scmp.lt.s32.totalorder %s14, 3
      %p243 = pnand %p241, %p242
      %p244 = pneg %p243
      // Predicated region
      $region41: #{gru_gate.1} parent=5 // pred_check
        _
      $region42: #{gru_gate.1} parent=5 // pred_check_branch
        %246 = sbr.rel (%p243) target = $region44
      $region43: #{gru_gate.1} parent=5 // pred_region
        %s247 = ssub.s32 %s14, 1
        // Predicated region
        $region45: #{gru_gate.1} parent=43 // pred_check
          %p248 = pneg %p87
        $region46: #{gru_gate.1} parent=43 // pred_check_branch
          %250 = sbr.rel (%p248) target = $region48
        $region47: #{gru_gate.1} parent=43 // pred_region
          %251 = dma.done [#allocation3], 3072
        $region48: #{gru_gate.1} parent=43 // pred_fallthru
          _
        // Predicated region
        $region49: #{gru_gate.1} parent=43 // pred_check
          %p252 = pneg %p108
        $region50: #{gru_gate.1} parent=43 // pred_check_branch
          %254 = sbr.rel (%p252) target = $region52
        $region51: #{gru_gate.1} parent=43 // pred_region
          %255 = dma.done [#allocation5], 2048
        $region52: #{gru_gate.1} parent=43 // pred_fallthru
          _
        %p256 = scmp.lt.s32.totalorder %s19, 1
        %s257 = scalar_select %p256, %s19, 1
        %s258 = smul.addr %s257, 8
        %s259 = scalar_lea.vmem %s0, %s258
        %p260 = pneg %p40
        %p261 = pneg %p37
        %p262 = scmp.lt.s32.totalorder %s19, 1
        %s263 = scalar_select %p262, %s19, 1
        %s264 = smul.addr %s263, 8
        %s265 = scalar_lea.vmem %s1, %s264
        %p266 = pneg %p66
        %p267 = pneg %p63
        %p268 = pneg %p87
        %p269 = pneg %p84
        %p270 = pneg %p108
        %p271 = pneg %p105
        %p272 = pneg %p129
        %p273 = pneg %p126
        %p274 = pneg %p150
        %p275 = pneg %p147
        %p276 = pneg %p176
        %p277 = pneg %p173
        %p278 = scmp.lt.s32.totalorder %s19, 1
        %s279 = scalar_select %p278, %s19, 1
        %s280 = smul.addr %s279, 8
        %s281 = scalar_lea.vmem %s6, %s280
        %p282 = scmp.lt.s32.totalorder %s19, 1
        %s283 = scalar_select %p282, %s19, 1
        %s284 = smul.addr %s283, 8
        %s285 = scalar_lea.vmem %s0, %s284
        %p286 = scmp.lt.s32.totalorder %s19, 1
        %s287 = scalar_select %p286, %s19, 1
        %s288 = smul.addr %s287, 8
        %s289 = scalar_lea.vmem %s1, %s288
        %p290 = scmp.lt.s32.totalorder %s19, 1
        %s291 = scalar_select %p290, %s19, 1
        %s292 = smul.addr %s291, 8
        %s293 = scalar_lea.vmem %s6, %s292
        %v295 = vld [vmem:[%s285] sm:$0xff]
        %v296 = vpack.c.bf16 %v295, %v295
        %v297 = vld [vmem:[%s289] sm:$0xff]
        %v298 = vpack.c.bf16 %v297, %v297
        %v299 = vld [vmem:[#allocation2] sm:$0xff]
        %v300 = vld [vmem:[#allocation2 + $0x8] sm:$0xf]
        %v301 = vld [vmem:[#allocation2 + $0xc] sm:$0xff]
        %v302 = vld [vmem:[#allocation2 + $0x14] sm:$0xf]
        %v303 = vld [vmem:[#allocation2 + $0x18] sm:$0xff]
        %v304 = vld [vmem:[#allocation2 + $0x20] sm:$0xf]
        %v305 = vld [vmem:[#allocation2 + $0x24] sm:$0xff]
        %v306 = vld [vmem:[#allocation2 + $0x2c] sm:$0xf]
        %v307 = vld [vmem:[#allocation2 + $0x30] sm:$0xff]
        %v308 = vld [vmem:[#allocation2 + $0x38] sm:$0xf]
        %v309 = vld [vmem:[#allocation2 + $0x3c] sm:$0xff]
        %v310 = vld [vmem:[#allocation2 + $0x44] sm:$0xf]
        %v311 = vld [vmem:[#allocation2 + $0x48] sm:$0xff]
        %v312 = vld [vmem:[#allocation2 + $0x50] sm:$0xf]
        %v313 = vld [vmem:[#allocation2 + $0x54] sm:$0xff]
        %v314 = vld [vmem:[#allocation2 + $0x5c] sm:$0xf]
        %v315 = vld [vmem:[#allocation2 + $0x60] sm:$0xff]
        %v316 = vld [vmem:[#allocation2 + $0x68] sm:$0xf]
        %v317 = vld [vmem:[#allocation2 + $0x6c] sm:$0xff]
        %v318 = vld [vmem:[#allocation2 + $0x74] sm:$0xf]
        %v319 = vld [vmem:[#allocation2 + $0x78] sm:$0xff]
        %v320 = vld [vmem:[#allocation2 + $0x80] sm:$0xf]
        %v321 = vld [vmem:[#allocation2 + $0x84] sm:$0xff]
        %v322 = vld [vmem:[#allocation2 + $0x8c] sm:$0xf]
        %v323 = vld [vmem:[#allocation2 + $0x90] sm:$0xff]
        %v324 = vld [vmem:[#allocation2 + $0x98] sm:$0xf]
        %v325 = vld [vmem:[#allocation2 + $0x9c] sm:$0xff]
        %v326 = vld [vmem:[#allocation2 + $0xa4] sm:$0xf]
        %v327 = vld [vmem:[#allocation2 + $0xa8] sm:$0xff]
        %v328 = vld [vmem:[#allocation2 + $0xb0] sm:$0xf]
        %v329 = vld [vmem:[#allocation2 + $0xb4] sm:$0xff]
        %v330 = vld [vmem:[#allocation2 + $0xbc] sm:$0xf]
        %v363 = vunpack.c.l.b16 %v299
        %v364 = vunpack.c.h.b16 %v299
        %v365 = vunpack.c.l.b16 %v300
        %v366 = vunpack.c.l.b16 %v301
        %v367 = vunpack.c.h.b16 %v301
        %v368 = vunpack.c.l.b16 %v302
        %v369 = vunpack.c.l.b16 %v303
        %v370 = vunpack.c.h.b16 %v303
        %v371 = vunpack.c.l.b16 %v304
        %v372 = vunpack.c.l.b16 %v305
        %v373 = vunpack.c.h.b16 %v305
        %v374 = vunpack.c.l.b16 %v306
        %v375 = vunpack.c.l.b16 %v307
        %v376 = vunpack.c.h.b16 %v307
        %v377 = vunpack.c.l.b16 %v308
        %v378 = vunpack.c.l.b16 %v309
        %v379 = vunpack.c.h.b16 %v309
        %v380 = vunpack.c.l.b16 %v310
        %v381 = vunpack.c.l.b16 %v311
        %v382 = vunpack.c.h.b16 %v311
        %v383 = vunpack.c.l.b16 %v312
        %v384 = vunpack.c.l.b16 %v313
        %v385 = vunpack.c.h.b16 %v313
        %v386 = vunpack.c.l.b16 %v314
        %v387 = vunpack.c.l.b16 %v315
        %v388 = vunpack.c.h.b16 %v315
        %v389 = vunpack.c.l.b16 %v316
        %v390 = vunpack.c.l.b16 %v317
        %v391 = vunpack.c.h.b16 %v317
        %v392 = vunpack.c.l.b16 %v318
        %v393 = vunpack.c.l.b16 %v319
        %v394 = vunpack.c.h.b16 %v319
        %v395 = vunpack.c.l.b16 %v320
        %v396 = vunpack.c.l.b16 %v321
        %v397 = vunpack.c.h.b16 %v321
        %v398 = vunpack.c.l.b16 %v322
        %v399 = vunpack.c.l.b16 %v323
        %v400 = vunpack.c.h.b16 %v323
        %v401 = vunpack.c.l.b16 %v324
        %v402 = vunpack.c.l.b16 %v325
        %v403 = vunpack.c.h.b16 %v325
        %v404 = vunpack.c.l.b16 %v326
        %v405 = vunpack.c.l.b16 %v327
        %v406 = vunpack.c.h.b16 %v327
        %v407 = vunpack.c.l.b16 %v328
        %v408 = vunpack.c.l.b16 %v329
        %v409 = vunpack.c.h.b16 %v329
        %v410 = vunpack.c.l.b16 %v330
        %v411 = vpack.c.b16 %v366, %v363
        %v412 = vpack.c.b16 %v367, %v364
        %v413 = vpack.c.b16 %v368, %v365
        %v414 = vpack.c.b16 %v372, %v369
        %v415 = vpack.c.b16 %v373, %v370
        %v416 = vpack.c.b16 %v374, %v371
        %v417 = vpack.c.b16 %v378, %v375
        %v418 = vpack.c.b16 %v379, %v376
        %v419 = vpack.c.b16 %v380, %v377
        %v420 = vpack.c.b16 %v384, %v381
        %v421 = vpack.c.b16 %v385, %v382
        %v422 = vpack.c.b16 %v386, %v383
        %v423 = vpack.c.b16 %v390, %v387
        %v424 = vpack.c.b16 %v391, %v388
        %v425 = vpack.c.b16 %v392, %v389
        %v426 = vpack.c.b16 %v396, %v393
        %v427 = vpack.c.b16 %v397, %v394
        %v428 = vpack.c.b16 %v398, %v395
        %v429 = vpack.c.b16 %v402, %v399
        %v430 = vpack.c.b16 %v403, %v400
        %v431 = vpack.c.b16 %v404, %v401
        %v432 = vpack.c.b16 %v408, %v405
        %v433 = vpack.c.b16 %v409, %v406
        %v434 = vpack.c.b16 %v410, %v407
        %459 = vmatprep.subr.bf16.mxu0 %v433
        %460 = vmatpush1.bf16.msra.mxu0 %v432
        %461 = vmatprep.subr.bf16.mxu0 %v430
        %462 = vmatpush1.bf16.msra.mxu0 %v429
        %463 = vmatprep.subr.bf16.mxu0 %v427
        %464 = vmatpush1.bf16.msra.mxu0 %v426
        %465 = vmatprep.subr.bf16.mxu0 %v424
        %466 = vmatpush1.bf16.msra.mxu0 %v423
        %467 = vmatprep.subr.bf16.mxu0 %v421
        %468 = vmatpush1.bf16.msra.mxu0 %v420
        %469 = vmatprep.subr.bf16.mxu0 %v418
        %470 = vmatpush1.bf16.msra.mxu0 %v417
        %471 = vmatprep.subr.bf16.mxu0 %v415
        %472 = vmatpush1.bf16.msra.mxu0 %v414
        %473 = vmatprep.subr.bf16.mxu0 %v412
        %474 = vmatpush1.bf16.msra.mxu0 %v411
        %475 = vmatprep.subr.bf16.mxu0 0
        %476 = vmatpush2.bf16.msra.mxu0 0
        %477 = vmatprep.subr.bf16.mxu0 0
        %478 = vmatpush2.bf16.msra.mxu0 0
        %479 = vmatprep.subr.bf16.mxu0 0
        %480 = vmatpush2.bf16.msra.mxu0 0
        %481 = vmatprep.subr.bf16.mxu0 0
        %482 = vmatpush2.bf16.msra.mxu0 0
        %483 = vmatprep.subr.bf16.mxu0 0
        %484 = vmatpush2.bf16.msra.mxu0 0
        %485 = vmatprep.subr.bf16.mxu0 0
        %486 = vmatpush2.bf16.msra.mxu0 0
        %487 = vmatprep.subr.bf16.mxu0 0
        %488 = vmatpush2.bf16.msra.mxu0 0
        %489 = vmatprep.subr.bf16.mxu0 0
        %490 = vmatpush2.bf16.msra.mxu0 0
        %491 = vmatprep.mubr.bf16.mxu0 0
        %492 = vmatmul.mubr.bf16.gmra.mxu0 %v298
        %v493 = vpop.f32.mrf.mxu0
        %v494 = vadd.f32 0.0, %v493
        %v495 = vpop.f32.mrf.mxu0
        %v496 = vadd.f32 0.0, %v495
        %v497 = vpop.f32.mrf.mxu0
        %v498 = vpop.f32.mrf.mxu0
        %499 = vdwg.mxu0
        %500 = vmatprep.subr.bf16.mxu0 0
        %501 = vmatpush1.bf16.msra.mxu0 %v434
        %502 = vmatprep.subr.bf16.mxu0 0
        %503 = vmatpush1.bf16.msra.mxu0 %v431
        %504 = vmatprep.subr.bf16.mxu0 0
        %505 = vmatpush1.bf16.msra.mxu0 %v428
        %506 = vmatprep.subr.bf16.mxu0 0
        %507 = vmatpush1.bf16.msra.mxu0 %v425
        %508 = vmatprep.subr.bf16.mxu0 0
        %509 = vmatpush1.bf16.msra.mxu0 %v422
        %510 = vmatprep.subr.bf16.mxu0 0
        %511 = vmatpush1.bf16.msra.mxu0 %v419
        %512 = vmatprep.subr.bf16.mxu0 0
        %513 = vmatpush1.bf16.msra.mxu0 %v416
        %514 = vmatprep.subr.bf16.mxu0 0
        %515 = vmatpush1.bf16.msra.mxu0 %v413
        %516 = vmatprep.subr.bf16.mxu0 0
        %517 = vmatpush2.bf16.msra.mxu0 0
        %518 = vmatprep.subr.bf16.mxu0 0
        %519 = vmatpush2.bf16.msra.mxu0 0
        %520 = vmatprep.subr.bf16.mxu0 0
        %521 = vmatpush2.bf16.msra.mxu0 0
        %522 = vmatprep.subr.bf16.mxu0 0
        %523 = vmatpush2.bf16.msra.mxu0 0
        %524 = vmatprep.subr.bf16.mxu0 0
        %525 = vmatpush2.bf16.msra.mxu0 0
        %526 = vmatprep.subr.bf16.mxu0 0
        %527 = vmatpush2.bf16.msra.mxu0 0
        %528 = vmatprep.subr.bf16.mxu0 0
        %529 = vmatpush2.bf16.msra.mxu0 0
        %530 = vmatprep.subr.bf16.mxu0 0
        %531 = vmatpush2.bf16.msra.mxu0 0
        %532 = vmatprep.mubr.bf16.mxu0 0
        %533 = vmatmul.mubr.bf16.gmra.mxu0 %v298
        %v534 = vpop.f32.mrf.mxu0
        %v535 = vadd.f32 0.0, %v534
        %v536 = vpop.f32.mrf.mxu0
        %v537 = vpop.f32.mrf.mxu0
        %v538 = vpop.f32.mrf.mxu0
        %539 = vdwg.mxu0
        %v540 = vld [vmem:[#allocation4] sm:$0xff]
        %v541 = vld [vmem:[#allocation4 + $0x8] sm:$0xff]
        %v542 = vld [vmem:[#allocation4 + $0x10] sm:$0xff]
        %v543 = vld [vmem:[#allocation4 + $0x18] sm:$0xff]
        %v544 = vld [vmem:[#allocation4 + $0x20] sm:$0xff]
        %v545 = vld [vmem:[#allocation4 + $0x28] sm:$0xff]
        %v546 = vld [vmem:[#allocation4 + $0x30] sm:$0xff]
        %v547 = vld [vmem:[#allocation4 + $0x38] sm:$0xff]
        %v548 = vld [vmem:[#allocation4 + $0x40] sm:$0xff]
        %v549 = vld [vmem:[#allocation4 + $0x48] sm:$0xff]
        %v550 = vld [vmem:[#allocation4 + $0x50] sm:$0xff]
        %v551 = vld [vmem:[#allocation4 + $0x58] sm:$0xff]
        %v552 = vld [vmem:[#allocation4 + $0x60] sm:$0xff]
        %v553 = vld [vmem:[#allocation4 + $0x68] sm:$0xff]
        %v554 = vld [vmem:[#allocation4 + $0x70] sm:$0xff]
        %v555 = vld [vmem:[#allocation4 + $0x78] sm:$0xff]
        %v572 = vunpack.c.l.b16 %v540
        %v573 = vunpack.c.h.b16 %v540
        %v574 = vunpack.c.l.b16 %v541
        %v575 = vunpack.c.h.b16 %v541
        %v576 = vunpack.c.l.b16 %v542
        %v577 = vunpack.c.h.b16 %v542
        %v578 = vunpack.c.l.b16 %v543
        %v579 = vunpack.c.h.b16 %v543
        %v580 = vunpack.c.l.b16 %v544
        %v581 = vunpack.c.h.b16 %v544
        %v582 = vunpack.c.l.b16 %v545
        %v583 = vunpack.c.h.b16 %v545
        %v584 = vunpack.c.l.b16 %v546
        %v585 = vunpack.c.h.b16 %v546
        %v586 = vunpack.c.l.b16 %v547
        %v587 = vunpack.c.h.b16 %v547
        %v588 = vunpack.c.l.b16 %v548
        %v589 = vunpack.c.h.b16 %v548
        %v590 = vunpack.c.l.b16 %v549
        %v591 = vunpack.c.h.b16 %v549
        %v592 = vunpack.c.l.b16 %v550
        %v593 = vunpack.c.h.b16 %v550
        %v594 = vunpack.c.l.b16 %v551
        %v595 = vunpack.c.h.b16 %v551
        %v596 = vunpack.c.l.b16 %v552
        %v597 = vunpack.c.h.b16 %v552
        %v598 = vunpack.c.l.b16 %v553
        %v599 = vunpack.c.h.b16 %v553
        %v600 = vunpack.c.l.b16 %v554
        %v601 = vunpack.c.h.b16 %v554
        %v602 = vunpack.c.l.b16 %v555
        %v603 = vunpack.c.h.b16 %v555
        %v604 = vpack.c.b16 %v574, %v572
        %v605 = vpack.c.b16 %v575, %v573
        %v606 = vpack.c.b16 %v578, %v576
        %v607 = vpack.c.b16 %v579, %v577
        %v608 = vpack.c.b16 %v582, %v580
        %v609 = vpack.c.b16 %v583, %v581
        %v610 = vpack.c.b16 %v586, %v584
        %v611 = vpack.c.b16 %v587, %v585
        %v612 = vpack.c.b16 %v590, %v588
        %v613 = vpack.c.b16 %v591, %v589
        %v614 = vpack.c.b16 %v594, %v592
        %v615 = vpack.c.b16 %v595, %v593
        %v616 = vpack.c.b16 %v598, %v596
        %v617 = vpack.c.b16 %v599, %v597
        %v618 = vpack.c.b16 %v602, %v600
        %v619 = vpack.c.b16 %v603, %v601
        %636 = vmatprep.subr.bf16.mxu0 %v619
        %637 = vmatpush1.bf16.msra.mxu0 %v618
        %638 = vmatprep.subr.bf16.mxu0 %v617
        %639 = vmatpush1.bf16.msra.mxu0 %v616
        %640 = vmatprep.subr.bf16.mxu0 %v615
        %641 = vmatpush1.bf16.msra.mxu0 %v614
        %642 = vmatprep.subr.bf16.mxu0 %v613
        %643 = vmatpush1.bf16.msra.mxu0 %v612
        %644 = vmatprep.subr.bf16.mxu0 %v611
        %645 = vmatpush1.bf16.msra.mxu0 %v610
        %646 = vmatprep.subr.bf16.mxu0 %v609
        %647 = vmatpush1.bf16.msra.mxu0 %v608
        %648 = vmatprep.subr.bf16.mxu0 %v607
        %649 = vmatpush1.bf16.msra.mxu0 %v606
        %650 = vmatprep.subr.bf16.mxu0 %v605
        %651 = vmatpush1.bf16.msra.mxu0 %v604
        %652 = vmatprep.subr.bf16.mxu0 0
        %653 = vmatpush2.bf16.msra.mxu0 0
        %654 = vmatprep.subr.bf16.mxu0 0
        %655 = vmatpush2.bf16.msra.mxu0 0
        %656 = vmatprep.subr.bf16.mxu0 0
        %657 = vmatpush2.bf16.msra.mxu0 0
        %658 = vmatprep.subr.bf16.mxu0 0
        %659 = vmatpush2.bf16.msra.mxu0 0
        %660 = vmatprep.subr.bf16.mxu0 0
        %661 = vmatpush2.bf16.msra.mxu0 0
        %662 = vmatprep.subr.bf16.mxu0 0
        %663 = vmatpush2.bf16.msra.mxu0 0
        %664 = vmatprep.subr.bf16.mxu0 0
        %665 = vmatpush2.bf16.msra.mxu0 0
        %666 = vmatprep.subr.bf16.mxu0 0
        %667 = vmatpush2.bf16.msra.mxu0 0
        %668 = vmatprep.mubr.bf16.mxu0 0
        %669 = vmatmul.mubr.bf16.gmra.mxu0 %v296
        %v670 = vpop.f32.mrf.mxu0
        %v671 = vadd.f32 0.0, %v670
        %v672 = vpop.f32.mrf.mxu0
        %v673 = vadd.f32 0.0, %v672
        %v674 = vpop.f32.mrf.mxu0
        %v675 = vpop.f32.mrf.mxu0
        %676 = vdwg.mxu0
        %v677 = vld [vmem:[%s5] sm:$0x1]
        %v679 = vlaneseq
        %v680 = vshrl.u32 %v679, 7
        %v681 = vsub.s32 0, %v680
        %v682 = vrot.slane %v677, %v681
        %v684 = vadd.f32 %v494, %v682
        %v685 = vadd.f32 %v684, %v671
        %v686 = vxor.u32 %v685, 2147483648
        %v687 = vmul.f32 %v686, 1.442695
        %v688 = vpow.pop %v687
        %v689 = vadd.f32 %v688, 1.0
        %v690 = vrcp.pop %v689
        %v691 = vmul.f32 1.0, %v690
        %v692 = vadd.f32 %v496, %v673
        %v693 = vxor.u32 %v692, 2147483648
        %v694 = vmul.f32 %v693, 1.442695
        %v695 = vpow.pop %v694
        %v696 = vadd.f32 %v695, 1.0
        %v697 = vrcp.pop %v696
        %v698 = vmul.f32 1.0, %v697
        %v699 = vmul.f32 %v698, %v295
        %v700 = vpack.c.bf16 %v699, %v699
        %v701 = vld [vmem:[%s4] sm:$0xf]
        %v702 = vld [vmem:[%s4 + $0x4] sm:$0xf]
        %v703 = vld [vmem:[%s4 + $0x8] sm:$0xf]
        %v704 = vld [vmem:[%s4 + $0xc] sm:$0xf]
        %v705 = vld [vmem:[%s4 + $0x10] sm:$0xf]
        %v706 = vld [vmem:[%s4 + $0x14] sm:$0xf]
        %v707 = vld [vmem:[%s4 + $0x18] sm:$0xf]
        %v708 = vld [vmem:[%s4 + $0x1c] sm:$0xf]
        %v709 = vld [vmem:[%s4 + $0x20] sm:$0xf]
        %v710 = vld [vmem:[%s4 + $0x24] sm:$0xf]
        %v711 = vld [vmem:[%s4 + $0x28] sm:$0xf]
        %v712 = vld [vmem:[%s4 + $0x2c] sm:$0xf]
        %v713 = vld [vmem:[%s4 + $0x30] sm:$0xf]
        %v714 = vld [vmem:[%s4 + $0x34] sm:$0xf]
        %v715 = vld [vmem:[%s4 + $0x38] sm:$0xf]
        %v716 = vld [vmem:[%s4 + $0x3c] sm:$0xf]
        %v733 = vunpack.c.l.b16 %v701
        %v734 = vunpack.c.l.b16 %v702
        %v735 = vunpack.c.l.b16 %v703
        %v736 = vunpack.c.l.b16 %v704
        %v737 = vunpack.c.l.b16 %v705
        %v738 = vunpack.c.l.b16 %v706
        %v739 = vunpack.c.l.b16 %v707
        %v740 = vunpack.c.l.b16 %v708
        %v741 = vunpack.c.l.b16 %v709
        %v742 = vunpack.c.l.b16 %v710
        %v743 = vunpack.c.l.b16 %v711
        %v744 = vunpack.c.l.b16 %v712
        %v745 = vunpack.c.l.b16 %v713
        %v746 = vunpack.c.l.b16 %v714
        %v747 = vunpack.c.l.b16 %v715
        %v748 = vunpack.c.l.b16 %v716
        %v749 = vpack.c.b16 %v734, %v733
        %v750 = vpack.c.b16 %v736, %v735
        %v751 = vpack.c.b16 %v738, %v737
        %v752 = vpack.c.b16 %v740, %v739
        %v753 = vpack.c.b16 %v742, %v741
        %v754 = vpack.c.b16 %v744, %v743
        %v755 = vpack.c.b16 %v746, %v745
        %v756 = vpack.c.b16 %v748, %v747
        %765 = vmatprep.subr.bf16.mxu0 0
        %766 = vmatpush1.bf16.msra.mxu0 %v756
        %767 = vmatprep.subr.bf16.mxu0 0
        %768 = vmatpush1.bf16.msra.mxu0 %v755
        %769 = vmatprep.subr.bf16.mxu0 0
        %770 = vmatpush1.bf16.msra.mxu0 %v754
        %771 = vmatprep.subr.bf16.mxu0 0
        %772 = vmatpush1.bf16.msra.mxu0 %v753
        %773 = vmatprep.subr.bf16.mxu0 0
        %774 = vmatpush1.bf16.msra.mxu0 %v752
        %775 = vmatprep.subr.bf16.mxu0 0
        %776 = vmatpush1.bf16.msra.mxu0 %v751
        %777 = vmatprep.subr.bf16.mxu0 0
        %778 = vmatpush1.bf16.msra.mxu0 %v750
        %779 = vmatprep.subr.bf16.mxu0 0
        %780 = vmatpush1.bf16.msra.mxu0 %v749
        %781 = vmatprep.subr.bf16.mxu0 0
        %782 = vmatpush2.bf16.msra.mxu0 0
        %783 = vmatprep.subr.bf16.mxu0 0
        %784 = vmatpush2.bf16.msra.mxu0 0
        %785 = vmatprep.subr.bf16.mxu0 0
        %786 = vmatpush2.bf16.msra.mxu0 0
        %787 = vmatprep.subr.bf16.mxu0 0
        %788 = vmatpush2.bf16.msra.mxu0 0
        %789 = vmatprep.subr.bf16.mxu0 0
        %790 = vmatpush2.bf16.msra.mxu0 0
        %791 = vmatprep.subr.bf16.mxu0 0
        %792 = vmatpush2.bf16.msra.mxu0 0
        %793 = vmatprep.subr.bf16.mxu0 0
        %794 = vmatpush2.bf16.msra.mxu0 0
        %795 = vmatprep.subr.bf16.mxu0 0
        %796 = vmatpush2.bf16.msra.mxu0 0
        %797 = vmatprep.mubr.bf16.mxu0 0
        %798 = vmatmul.mubr.bf16.gmra.mxu0 %v700
        %v799 = vpop.f32.mrf.mxu0
        %v800 = vadd.f32 0.0, %v799
        %v801 = vpop.f32.mrf.mxu0
        %v802 = vpop.f32.mrf.mxu0
        %v803 = vpop.f32.mrf.mxu0
        %804 = vdwg.mxu0
        %v805 = vadd.f32 %v535, %v800
        %v806 = vtanh.pop %v805
        %v807 = vsub.f32 %v806, %v295
        %v808 = vmul.f32 %v691, %v807
        %v809 = vadd.f32 %v295, %v808
        %810 = vst [vmem:[%s293] sm:$0xff] %v809
        %p811 = scmp.lt.s32.totalorder %s19, 1
        %s812 = scalar_select %p811, %s19, 1
        %s813 = smul.addr %s812, 8
        %s814 = scalar_lea.vmem %s6, %s813
        // Predicated region
        $region53: #{gru_gate.1} parent=43 // pred_check
          %p815 = pneg %p173
        $region54: #{gru_gate.1} parent=43 // pred_check_branch
          %817 = sbr.rel (%p815) target = $region56
        $region55: #{gru_gate.1} parent=43 // pred_region
          _
        $region56: #{gru_gate.1} parent=43 // pred_fallthru
          _
      $region44: #{gru_gate.1} parent=5 // pred_fallthru
        _
      %p818 = scmp.le.s32.totalorder 2, %s14
      // Predicated region
      $region57: #{gru_gate.1} parent=5 // pred_check
        %p819 = pneg %p818
      $region58: #{gru_gate.1} parent=5 // pred_check_branch
        %821 = sbr.rel (%p819) target = $region60
      $region59: #{gru_gate.1} parent=5 // pred_region
        %s822 = ssub.s32 %s14, 2
        // Predicated region
        $region61: #{gru_gate.1} parent=59 // pred_check
          %p823 = pneg %p179
        $region62: #{gru_gate.1} parent=59 // pred_check_branch
          %825 = sbr.rel (%p823) target = $region64
        $region63: #{gru_gate.1} parent=59 // pred_region
          %p826 = scmp.lt.s32.totalorder %s20, 1
          %s827 = scalar_select %p826, %s20, 1
          %s828 = smul.addr %s827, 8
          %s829 = scalar_lea.vmem %s6, %s828
        $region64: #{gru_gate.1} parent=59 // pred_fallthru
          _
      $region60: #{gru_gate.1} parent=5 // pred_fallthru
        _
    $region6: #{gru_gate.1} parent=1 // loop_footer
      %s18 = sadd.s32 1, %s14
    $region7: #{gru_gate.1} parent=1 // loop_footer_branch
      %13 = sbr.rel target = $region3
    $region8: #{gru_gate.1} parent=1 // loop_exit
      _
    %830 = vsyncpa [#allocation3], 1
    %s831 = scalar_lea.sflag [#allocation3], 1
    %832 = vsyncpa %s831, 1
    %833 = vsyncpa [#allocation5], 1

</llo_original>
